<compile_context>
chip_gen: v7x
topology: tpu7x:2x2x1
jax: 0.10.0
libtpu: 0.0.40
codegen_flags: <defaults>
</compile_context>

<pallas_src>
import functools
import math

import jax
import jax.numpy as jnp
from jax.experimental import pallas as pl
from jax.experimental.pallas import tpu as pltpu


def _layer_norm(x, g, b, eps=1e-5):
    mu = jnp.mean(x, axis=-1, keepdims=True)
    var = jnp.mean((x - mu) ** 2, axis=-1, keepdims=True)
    return (x - mu) * jax.lax.rsqrt(var + eps) * g + b


def block_kernel(x_ref, ln1g_ref, ln1b_ref, wqkv_ref, bqkv_ref,
                 wpr_ref, bpr_ref, ln2g_ref, ln2b_ref,
                 wfc_ref, bfc_ref, wp2_ref, bp2_ref,
                 cos_ref, sin_ref, out_ref, *, n_head):
    f32 = jnp.float32
    bf16 = jnp.bfloat16

    x = x_ref[0]                                    # (T, C) f32
    T, C = x.shape
    hd = C // n_head
    hd2 = hd // 2

    # ---------------- ln_1 ----------------
    xn = _layer_norm(x, ln1g_ref[...], ln1b_ref[...])

    # ---------------- fused qkv projection (bf16 MXU, f32 accumulate) -------
    qkv = jnp.dot(xn.astype(bf16), wqkv_ref[...],
                  preferred_element_type=f32) + bqkv_ref[...]

    # Head-leading (n_head, T, hd) layout so QK^T / PV run as batched einsums.
    def heads(block):                               # block: (T, C)
        return jnp.stack(
            [block[:, h * hd:(h + 1) * hd] for h in range(n_head)], axis=0)

    q3 = heads(qkv[:, 0 * C:1 * C])
    k3 = heads(qkv[:, 1 * C:2 * C])
    v3 = heads(qkv[:, 2 * C:3 * C])

    # ---------------- RoPE: pure elementwise --------------------------------
    # Host pre-permuted the q/k weight columns to [even | odd] per head, so:
    #   rotated = t * [cos|cos] + swap_halves(t) * [-sin|sin]
    # exactly reproduces torch's cat([x1*cos - x2*sin, x1*sin + x2*cos], -1).
    cosf = cos_ref[...][None]                       # (1, T, hd)
    sinf = sin_ref[...][None]                       # (1, T, hd)

    def rope(t):                                    # t: (n_head, T, hd)
        swapped = jnp.concatenate([t[..., hd2:], t[..., :hd2]], axis=-1)
        return t * cosf + swapped * sinf

    qr = rope(q3).astype(bf16)                      # 1/sqrt(hd) already folded in
    kr = rope(k3).astype(bf16)

    # ---------------- causal attention, all heads batched -------------------
    # TODO(synk): flash-style KV tiling (online softmax) for large T.
    s = jnp.einsum('hqd,hkd->hqk', qr, kr, preferred_element_type=f32)

    row = jax.lax.broadcasted_iota(jnp.int32, (T, T), 0)
    col = jax.lax.broadcasted_iota(jnp.int32, (T, T), 1)
    s = jnp.where((col <= row)[None], s, -1e30)

    s_max = jnp.max(s, axis=-1, keepdims=True)
    p = jnp.exp(s - s_max)
    denom = jnp.sum(p, axis=-1, keepdims=True)
    p = p * pl.reciprocal(denom, approx=True)       # EUP reciprocal (free slot)

    y3 = jnp.einsum('hqk,hkd->hqd', p.astype(bf16), v3.astype(bf16),
                    preferred_element_type=f32)     # (n_head, T, hd)

    # heads -> lane-dense (T, C) slab for the output projection
    y = jnp.concatenate([y3[h] for h in range(n_head)], axis=-1)

    # attn_dropout / resid_dropout are identity in eval mode.
    y = jnp.dot(y.astype(bf16), wpr_ref[...],
                preferred_element_type=f32) + bpr_ref[...]
    x_res = x + y                                   # residual 1

    # ---------------- ln_2 + MLP ----------------
    x2n = _layer_norm(x_res, ln2g_ref[...], ln2b_ref[...])
    h1 = jnp.dot(x2n.astype(bf16), wfc_ref[...],
                 preferred_element_type=f32) + bfc_ref[...]
    g = jax.nn.gelu(h1, approximate=True)           # GELU(approximate='tanh')
    mlp = jnp.dot(g.astype(bf16), wp2_ref[...],
                  preferred_element_type=f32) + bp2_ref[...]

    out_ref[0] = x_res + mlp                        # residual 2


def _vmem_limit_bytes(kp, T, C, n_head):
    wbytes = sum(int(kp[k].size) * kp[k].dtype.itemsize
                 for k in ('w_qkv', 'w_pr', 'w_fc', 'w_p2'))
    act_bytes = 4 * (3 * T * C + 6 * T * C + 3 * n_head * T * T + 2 * T * 4 * C)
    est = 2 * wbytes + 2 * act_bytes + (4 << 20)
    return int(min(max(est, 16 << 20), 64 << 20))


def block_forward(x, kernel_params, n_head):
    B, T, C = x.shape
    kp = kernel_params
    kernel = functools.partial(block_kernel, n_head=n_head)

    def full(a):
        return pl.BlockSpec(a.shape, lambda b, nd=a.ndim: (0,) * nd)

    order = ('ln1_g', 'ln1_b', 'w_qkv', 'b_qkv', 'w_pr', 'b_pr',
             'ln2_g', 'ln2_b', 'w_fc', 'b_fc', 'w_p2', 'b_p2',
             'rope_cos', 'rope_sin')
    in_specs = ([pl.BlockSpec((1, T, C), lambda b: (b, 0, 0))]
                + [full(kp[k]) for k in order])

    return pl.pallas_call(
        kernel,
        out_shape=jax.ShapeDtypeStruct((B, T, C), jnp.float32),
        grid_spec=pltpu.PrefetchScalarGridSpec(
            num_scalar_prefetch=0,
            grid=(B,),
            in_specs=in_specs,
            out_specs=pl.BlockSpec((1, T, C), lambda b: (b, 0, 0)),
        ),
        compiler_params=pltpu.CompilerParams(
            dimension_semantics=("parallel",),
            vmem_limit_bytes=_vmem_limit_bytes(kp, T, C, n_head)),
    )(x, *[kp[k] for k in order])


# ---------------------------------------------------------------------------
# Host-side parameter preparation for the kernel (permutation / scale folding,
# bf16 weight cast, lane-dense RoPE tables).
# ---------------------------------------------------------------------------
def prepare_kernel_params(p, T, C, n_head):
    assert C % n_head == 0
    hd = C // n_head
    assert hd % 2 == 0
    f32, bf16 = jnp.float32, jnp.bfloat16

    # within-head permutation: [0,2,4,...,1,3,5,...]  (evens then odds)
    perm_within = jnp.concatenate([jnp.arange(0, hd, 2), jnp.arange(1, hd, 2)])
    perm = (jnp.arange(n_head)[:, None] * hd + perm_within[None, :]).reshape(-1)
    scale = 1.0 / math.sqrt(hd)

    w_qkv, b_qkv = p['w_qkv'], p['b_qkv']
    wq = w_qkv[:, 0 * C:1 * C][:, perm] * scale     # fold 1/sqrt(hd) into q
    wk = w_qkv[:, 1 * C:2 * C][:, perm]
    wv = w_qkv[:, 2 * C:3 * C]
    bq = b_qkv[:, 0 * C:1 * C][:, perm] * scale
    bk = b_qkv[:, 1 * C:2 * C][:, perm]
    bv = b_qkv[:, 2 * C:3 * C]

    # RoPE tables (exactly as in apply_rotary_emb), expanded to (T, hd).
    freqs = jnp.arange(0, hd, 2, dtype=f32) / hd
    theta = 1000.0 ** (-freqs)
    positions = jnp.arange(T, dtype=f32)
    angles = positions[:, None] * theta[None, :]            # (T, hd//2)
    cos, sin = jnp.cos(angles), jnp.sin(angles)
    rope_cos = jnp.concatenate([cos, cos], axis=-1)         # (T, hd)
    rope_sin = jnp.concatenate([-sin, sin], axis=-1)        # (T, hd)

    return {
        'ln1_g': p['ln1_g'], 'ln1_b': p['ln1_b'],
        'w_qkv': jnp.concatenate([wq, wk, wv], axis=1).astype(bf16),
        'b_qkv': jnp.concatenate([bq, bk, bv], axis=1),
        'w_pr': p['w_pr'].astype(bf16), 'b_pr': p['b_pr'],
        'ln2_g': p['ln2_g'], 'ln2_b': p['ln2_b'],
        'w_fc': p['w_fc'].astype(bf16), 'b_fc': p['b_fc'],
        'w_p2': p['w_p2'].astype(bf16), 'b_p2': p['b_p2'],
        'rope_cos': rope_cos, 'rope_sin': rope_sin,
    }


# ---------------------------------------------------------------------------
# Pure-JAX f32 reference (mirrors the PyTorch forward, eval mode).
# ---------------------------------------------------------------------------
def _rope_ref(x, sin, cos):           # x: (B, nh, T, hd)
    x1 = x[..., 0::2]
    x2 = x[..., 1::2]
    return jnp.concatenate([x1 * cos - x2 * sin, x1 * sin + x2 * cos], axis=-1)


def block_ref(x, p, n_head):
    B, T, C = x.shape
    hd = C // n_head
    xn = _layer_norm(x, p['ln1_g'], p['ln1_b'])
    qkv = xn @ p['w_qkv'] + p['b_qkv']
    q, k, v = jnp.split(qkv, 3, axis=-1)
    heads = lambda t: t.reshape(B, T, n_head, hd).transpose(0, 2, 1, 3)
    q, k, v = heads(q), heads(k), heads(v)
    q = _rope_ref(q, p['sin'], p['cos'])
    k = _rope_ref(k, p['sin'], p['cos'])
    s = jnp.einsum('bhqd,bhkd->bhqk', q, k) / math.sqrt(hd)
    mask = jnp.tril(jnp.ones((T, T), bool))
    s = jnp.where(mask, s, -jnp.inf)
    a = jax.nn.softmax(s, axis=-1)
    y = jnp.einsum('bhqk,bhkd->bhqd', a, v).transpose(0, 2, 1, 3).reshape(B, T, C)
    y = y @ p['w_pr'] + p['b_pr']
    x = x + y
    x2n = _layer_norm(x, p['ln2_g'], p['ln2_b'])
    h = jax.nn.gelu(x2n @ p['w_fc'] + p['b_fc'], approximate=True)
    return x + (h @ p['w_p2'] + p['b_p2'])


def make_params(key, C, T, n_head):
    hd = C // n_head
    ks = jax.random.split(key, 8)
    f32 = jnp.float32
    params = {
        'ln1_g': jnp.ones((1, C), f32),
        'ln1_b': jnp.zeros((1, C), f32),
        'w_qkv': 0.02 * jax.random.normal(ks[0], (C, 3 * C), f32),
        'b_qkv': 0.02 * jax.random.normal(ks[1], (1, 3 * C), f32),
        'w_pr': 0.02 * jax.random.normal(ks[2], (C, C), f32),
        'b_pr': 0.02 * jax.random.normal(ks[3], (1, C), f32),
        'ln2_g': jnp.ones((1, C), f32),
        'ln2_b': jnp.zeros((1, C), f32),
        'w_fc': 0.02 * jax.random.normal(ks[4], (C, 4 * C), f32),
        'b_fc': 0.02 * jax.random.normal(ks[5], (1, 4 * C), f32),
        'w_p2': 0.02 * jax.random.normal(ks[6], (4 * C, C), f32),
        'b_p2': 0.02 * jax.random.normal(ks[7], (1, C), f32),
    }
    freqs = jnp.arange(0, hd, 2, dtype=f32) / hd
    theta = 1000.0 ** (-freqs)
    positions = jnp.arange(T, dtype=f32)
    angles = positions[:, None] * theta[None, :]
    params['sin'] = jnp.sin(angles)
    params['cos'] = jnp.cos(angles)
    return params


if __name__ == "__main__":
    B, T, C, n_head = 2, 8, 32, 4
    key = jax.random.PRNGKey(0)
    kx, kparam = jax.random.split(key)
    x = jax.random.normal(kx, (B, T, C), jnp.float32)
    params = make_params(kparam, C, T, n_head)
    kparams = prepare_kernel_params(params, T, C, n_head)

    out = block_forward(x, kparams, n_head)
    out = jax.block_until_ready(out)

    ref = block_ref(x, params, n_head)
    assert out.shape == (B, T, C)
    # Tolerance accounts for bf16 matmul operands vs. the pure-f32 reference.
    err = jnp.max(jnp.abs(out - ref))
    assert jnp.allclose(out, ref, rtol=2e-2, atol=2e-2), f"max abs err = {err}"
    print("KERNEL_OK")
</pallas_src>

<mosaic_0001>
module attributes {stable_mosaic.version = 11 : i64} {
  func.func @block_kernel(%arg0: i32, %arg1: memref<1x8x32xf32, #tpu.memory_space<vmem>>, %arg2: memref<1x32xf32, #tpu.memory_space<vmem>>, %arg3: memref<1x32xf32, #tpu.memory_space<vmem>>, %arg4: memref<32x96xbf16, #tpu.memory_space<vmem>>, %arg5: memref<1x96xf32, #tpu.memory_space<vmem>>, %arg6: memref<32x32xbf16, #tpu.memory_space<vmem>>, %arg7: memref<1x32xf32, #tpu.memory_space<vmem>>, %arg8: memref<1x32xf32, #tpu.memory_space<vmem>>, %arg9: memref<1x32xf32, #tpu.memory_space<vmem>>, %arg10: memref<32x128xbf16, #tpu.memory_space<vmem>>, %arg11: memref<1x128xf32, #tpu.memory_space<vmem>>, %arg12: memref<128x32xbf16, #tpu.memory_space<vmem>>, %arg13: memref<1x32xf32, #tpu.memory_space<vmem>>, %arg14: memref<8x8xf32, #tpu.memory_space<vmem>>, %arg15: memref<8x8xf32, #tpu.memory_space<vmem>>, %arg16: memref<1x8x32xf32, #tpu.memory_space<vmem>>) attributes {dimension_semantics = [#tpu.dimension_semantics<parallel>], iteration_bounds = array<i64: 2>, scalar_prefetch = 0 : i64, scratch_operands = 0 : i64, tpu.core_type = #tpu.core_type<tc>, window_params = [{transform_indices = @transform_0, window_bounds = array<i64: 1, 8, 32>}, {pipeline_mode = #tpu.pipeline_mode<synchronous>, transform_indices = @transform_1, window_bounds = array<i64: 1, 32>}, {pipeline_mode = #tpu.pipeline_mode<synchronous>, transform_indices = @transform_2, window_bounds = array<i64: 1, 32>}, {pipeline_mode = #tpu.pipeline_mode<synchronous>, transform_indices = @transform_3, window_bounds = array<i64: 32, 96>}, {pipeline_mode = #tpu.pipeline_mode<synchronous>, transform_indices = @transform_4, window_bounds = array<i64: 1, 96>}, {pipeline_mode = #tpu.pipeline_mode<synchronous>, transform_indices = @transform_5, window_bounds = array<i64: 32, 32>}, {pipeline_mode = #tpu.pipeline_mode<synchronous>, transform_indices = @transform_6, window_bounds = array<i64: 1, 32>}, {pipeline_mode = #tpu.pipeline_mode<synchronous>, transform_indices = @transform_7, window_bounds = array<i64: 1, 32>}, {pipeline_mode = #tpu.pipeline_mode<synchronous>, transform_indices = @transform_8, window_bounds = array<i64: 1, 32>}, {pipeline_mode = #tpu.pipeline_mode<synchronous>, transform_indices = @transform_9, window_bounds = array<i64: 32, 128>}, {pipeline_mode = #tpu.pipeline_mode<synchronous>, transform_indices = @transform_10, window_bounds = array<i64: 1, 128>}, {pipeline_mode = #tpu.pipeline_mode<synchronous>, transform_indices = @transform_11, window_bounds = array<i64: 128, 32>}, {pipeline_mode = #tpu.pipeline_mode<synchronous>, transform_indices = @transform_12, window_bounds = array<i64: 1, 32>}, {pipeline_mode = #tpu.pipeline_mode<synchronous>, transform_indices = @transform_13, window_bounds = array<i64: 8, 8>}, {pipeline_mode = #tpu.pipeline_mode<synchronous>, transform_indices = @transform_14, window_bounds = array<i64: 8, 8>}, {transform_indices = @transform_15, window_bounds = array<i64: 1, 8, 32>}]} {
    %c0 = arith.constant 0 : index
    %c0_0 = arith.constant 0 : index
    %c0_1 = arith.constant 0 : index
    %0 = vector.load %arg1[%c0, %c0_0, %c0_1] : memref<1x8x32xf32, #tpu.memory_space<vmem>>, vector<1x8x32xf32>
    %1 = vector.shape_cast %0 : vector<1x8x32xf32> to vector<8x32xf32>
    %c0_2 = arith.constant 0 : index
    %c0_3 = arith.constant 0 : index
    %2 = vector.load %arg2[%c0_2, %c0_3] : memref<1x32xf32, #tpu.memory_space<vmem>>, vector<1x32xf32>
    %c0_4 = arith.constant 0 : index
    %c0_5 = arith.constant 0 : index
    %3 = vector.load %arg3[%c0_4, %c0_5] : memref<1x32xf32, #tpu.memory_space<vmem>>, vector<1x32xf32>
    %cst = arith.constant dense<0.000000e+00> : vector<8xf32>
    %4 = vector.multi_reduction <add>, %1, %cst [1] : vector<8x32xf32> to vector<8xf32>
    %5 = vector.shape_cast %4 : vector<8xf32> to vector<8x1xf32>
    %cst_6 = arith.constant 3.200000e+01 : f32
    %6 = vector.broadcast %cst_6 : f32 to vector<8x1xf32>
    %7 = arith.divf %5, %6 : vector<8x1xf32>
    %8 = vector.broadcast %7 : vector<8x1xf32> to vector<8x32xf32>
    %9 = arith.subf %1, %8 : vector<8x32xf32>
    %10 = arith.mulf %9, %9 : vector<8x32xf32>
    %cst_7 = arith.constant dense<0.000000e+00> : vector<8xf32>
    %11 = vector.multi_reduction <add>, %10, %cst_7 [1] : vector<8x32xf32> to vector<8xf32>
    %12 = vector.shape_cast %11 : vector<8xf32> to vector<8x1xf32>
    %cst_8 = arith.constant 3.200000e+01 : f32
    %13 = vector.broadcast %cst_8 : f32 to vector<8x1xf32>
    %14 = arith.divf %12, %13 : vector<8x1xf32>
    %15 = vector.broadcast %7 : vector<8x1xf32> to vector<8x32xf32>
    %16 = arith.subf %1, %15 : vector<8x32xf32>
    %cst_9 = arith.constant 9.99999974E-6 : f32
    %17 = vector.broadcast %cst_9 : f32 to vector<8x1xf32>
    %18 = arith.addf %14, %17 : vector<8x1xf32>
    %19 = math.rsqrt %18 : vector<8x1xf32>
    %20 = vector.broadcast %19 : vector<8x1xf32> to vector<8x32xf32>
    %21 = arith.mulf %16, %20 : vector<8x32xf32>
    %22 = vector.broadcast %2 : vector<1x32xf32> to vector<8x32xf32>
    %23 = arith.mulf %21, %22 : vector<8x32xf32>
    %24 = vector.broadcast %3 : vector<1x32xf32> to vector<8x32xf32>
    %25 = arith.addf %23, %24 : vector<8x32xf32>
    %26 = arith.truncf %25 : vector<8x32xf32> to vector<8x32xbf16>
    %c0_10 = arith.constant 0 : index
    %c0_11 = arith.constant 0 : index
    %27 = vector.load %arg4[%c0_10, %c0_11] : memref<32x96xbf16, #tpu.memory_space<vmem>>, vector<32x96xbf16>
    %cst_12 = arith.constant dense<0.000000e+00> : vector<8x96xf32>
    %28 = tpu.matmul %26, %27, %cst_12 {dimension_numbers = #tpu.dot_dimension_numbers<[1], [0], [0], [1], [0, 0, 1, 1], [], []>} : vector<8x32xbf16>, vector<32x96xbf16>, vector<8x96xf32> -> vector<8x96xf32>
    %c0_13 = arith.constant 0 : index
    %c0_14 = arith.constant 0 : index
    %29 = vector.load %arg5[%c0_13, %c0_14] : memref<1x96xf32, #tpu.memory_space<vmem>>, vector<1x96xf32>
    %30 = vector.broadcast %29 : vector<1x96xf32> to vector<8x96xf32>
    %31 = arith.addf %28, %30 : vector<8x96xf32>
    %32 = vector.extract_strided_slice %31 {offsets = [0, 0], sizes = [8, 32], strides = [1, 1]} : vector<8x96xf32> to vector<8x32xf32>
    %33 = vector.extract_strided_slice %32 {offsets = [0, 0], sizes = [8, 8], strides = [1, 1]} : vector<8x32xf32> to vector<8x8xf32>
    %34 = vector.extract_strided_slice %32 {offsets = [0, 8], sizes = [8, 8], strides = [1, 1]} : vector<8x32xf32> to vector<8x8xf32>
    %35 = vector.extract_strided_slice %32 {offsets = [0, 16], sizes = [8, 8], strides = [1, 1]} : vector<8x32xf32> to vector<8x8xf32>
    %36 = vector.extract_strided_slice %32 {offsets = [0, 24], sizes = [8, 8], strides = [1, 1]} : vector<8x32xf32> to vector<8x8xf32>
    %37 = vector.shape_cast %33 : vector<8x8xf32> to vector<1x8x8xf32>
    %38 = vector.shape_cast %34 : vector<8x8xf32> to vector<1x8x8xf32>
    %39 = vector.shape_cast %35 : vector<8x8xf32> to vector<1x8x8xf32>
    %40 = vector.shape_cast %36 : vector<8x8xf32> to vector<1x8x8xf32>
    %41 = tpu.concatenate %37, %38, %39, %40 in 0 : vector<1x8x8xf32>, vector<1x8x8xf32>, vector<1x8x8xf32>, vector<1x8x8xf32> -> vector<4x8x8xf32>
    %42 = vector.extract_strided_slice %31 {offsets = [0, 32], sizes = [8, 32], strides = [1, 1]} : vector<8x96xf32> to vector<8x32xf32>
    %43 = vector.extract_strided_slice %42 {offsets = [0, 0], sizes = [8, 8], strides = [1, 1]} : vector<8x32xf32> to vector<8x8xf32>
    %44 = vector.extract_strided_slice %42 {offsets = [0, 8], sizes = [8, 8], strides = [1, 1]} : vector<8x32xf32> to vector<8x8xf32>
    %45 = vector.extract_strided_slice %42 {offsets = [0, 16], sizes = [8, 8], strides = [1, 1]} : vector<8x32xf32> to vector<8x8xf32>
    %46 = vector.extract_strided_slice %42 {offsets = [0, 24], sizes = [8, 8], strides = [1, 1]} : vector<8x32xf32> to vector<8x8xf32>
    %47 = vector.shape_cast %43 : vector<8x8xf32> to vector<1x8x8xf32>
    %48 = vector.shape_cast %44 : vector<8x8xf32> to vector<1x8x8xf32>
    %49 = vector.shape_cast %45 : vector<8x8xf32> to vector<1x8x8xf32>
    %50 = vector.shape_cast %46 : vector<8x8xf32> to vector<1x8x8xf32>
    %51 = tpu.concatenate %47, %48, %49, %50 in 0 : vector<1x8x8xf32>, vector<1x8x8xf32>, vector<1x8x8xf32>, vector<1x8x8xf32> -> vector<4x8x8xf32>
    %52 = vector.extract_strided_slice %31 {offsets = [0, 64], sizes = [8, 32], strides = [1, 1]} : vector<8x96xf32> to vector<8x32xf32>
    %53 = vector.extract_strided_slice %52 {offsets = [0, 0], sizes = [8, 8], strides = [1, 1]} : vector<8x32xf32> to vector<8x8xf32>
    %54 = vector.extract_strided_slice %52 {offsets = [0, 8], sizes = [8, 8], strides = [1, 1]} : vector<8x32xf32> to vector<8x8xf32>
    %55 = vector.extract_strided_slice %52 {offsets = [0, 16], sizes = [8, 8], strides = [1, 1]} : vector<8x32xf32> to vector<8x8xf32>
    %56 = vector.extract_strided_slice %52 {offsets = [0, 24], sizes = [8, 8], strides = [1, 1]} : vector<8x32xf32> to vector<8x8xf32>
    %57 = vector.shape_cast %53 : vector<8x8xf32> to vector<1x8x8xf32>
    %58 = vector.shape_cast %54 : vector<8x8xf32> to vector<1x8x8xf32>
    %59 = vector.shape_cast %55 : vector<8x8xf32> to vector<1x8x8xf32>
    %60 = vector.shape_cast %56 : vector<8x8xf32> to vector<1x8x8xf32>
    %61 = tpu.concatenate %57, %58, %59, %60 in 0 : vector<1x8x8xf32>, vector<1x8x8xf32>, vector<1x8x8xf32>, vector<1x8x8xf32> -> vector<4x8x8xf32>
    %c0_15 = arith.constant 0 : index
    %c0_16 = arith.constant 0 : index
    %62 = vector.load %arg14[%c0_15, %c0_16] : memref<8x8xf32, #tpu.memory_space<vmem>>, vector<8x8xf32>
    %63 = vector.shape_cast %62 : vector<8x8xf32> to vector<1x8x8xf32>
    %c0_17 = arith.constant 0 : index
    %c0_18 = arith.constant 0 : index
    %64 = vector.load %arg15[%c0_17, %c0_18] : memref<8x8xf32, #tpu.memory_space<vmem>>, vector<8x8xf32>
    %65 = vector.shape_cast %64 : vector<8x8xf32> to vector<1x8x8xf32>
    %66 = vector.extract_strided_slice %41 {offsets = [0, 0, 4], sizes = [4, 8, 4], strides = [1, 1, 1]} : vector<4x8x8xf32> to vector<4x8x4xf32>
    %67 = vector.extract_strided_slice %41 {offsets = [0, 0, 0], sizes = [4, 8, 4], strides = [1, 1, 1]} : vector<4x8x8xf32> to vector<4x8x4xf32>
    %68 = tpu.concatenate %66, %67 in 2 : vector<4x8x4xf32>, vector<4x8x4xf32> -> vector<4x8x8xf32>
    %69 = vector.broadcast %63 : vector<1x8x8xf32> to vector<4x8x8xf32>
    %70 = arith.mulf %41, %69 : vector<4x8x8xf32>
    %71 = vector.broadcast %65 : vector<1x8x8xf32> to vector<4x8x8xf32>
    %72 = arith.mulf %68, %71 : vector<4x8x8xf32>
    %73 = arith.addf %70, %72 : vector<4x8x8xf32>
    %74 = arith.truncf %73 : vector<4x8x8xf32> to vector<4x8x8xbf16>
    %75 = vector.extract_strided_slice %51 {offsets = [0, 0, 4], sizes = [4, 8, 4], strides = [1, 1, 1]} : vector<4x8x8xf32> to vector<4x8x4xf32>
    %76 = vector.extract_strided_slice %51 {offsets = [0, 0, 0], sizes = [4, 8, 4], strides = [1, 1, 1]} : vector<4x8x8xf32> to vector<4x8x4xf32>
    %77 = tpu.concatenate %75, %76 in 2 : vector<4x8x4xf32>, vector<4x8x4xf32> -> vector<4x8x8xf32>
    %78 = vector.broadcast %63 : vector<1x8x8xf32> to vector<4x8x8xf32>
    %79 = arith.mulf %51, %78 : vector<4x8x8xf32>
    %80 = vector.broadcast %65 : vector<1x8x8xf32> to vector<4x8x8xf32>
    %81 = arith.mulf %77, %80 : vector<4x8x8xf32>
    %82 = arith.addf %79, %81 : vector<4x8x8xf32>
    %83 = arith.truncf %82 : vector<4x8x8xf32> to vector<4x8x8xbf16>
    "tpu.trace_start"() <{level = 10 : i32, message = "hqd,hkd->hqk"}> : () -> ()
    %cst_19 = arith.constant dense<0.000000e+00> : vector<4x8x8xf32>
    %84 = tpu.matmul %74, %83, %cst_19 {dimension_numbers = #tpu.dot_dimension_numbers<[2], [2], [1], [1], [0, 0, 0, 1, 1, 1], [0], [0]>} : vector<4x8x8xbf16>, vector<4x8x8xbf16>, vector<4x8x8xf32> -> vector<4x8x8xf32>
    "tpu.trace_stop"() : () -> ()
    %85 = tpu.iota {dimensions = array<i32: 0>} : vector<8x8xi32>
    %86 = tpu.iota {dimensions = array<i32: 1>} : vector<8x8xi32>
    %87 = arith.cmpi sle, %86, %85 : vector<8x8xi32>
    %88 = vector.shape_cast %87 : vector<8x8xi1> to vector<1x8x8xi1>
    %cst_20 = arith.constant -1.000000e+30 : f32
    %89 = vector.shape_cast %88 : vector<1x8x8xi1> to vector<1x8x8xi1>
    %90 = vector.broadcast %89 : vector<1x8x8xi1> to vector<4x8x8xi1>
    %91 = vector.broadcast %cst_20 : f32 to vector<4x8x8xf32>
    %92 = arith.select %90, %84, %91 : vector<4x8x8xi1>, vector<4x8x8xf32>
    %cst_21 = arith.constant dense<0xFF800000> : vector<4x8xf32>
    %93 = vector.multi_reduction <maximumf>, %92, %cst_21 [2] : vector<4x8x8xf32> to vector<4x8xf32>
    %94 = vector.shape_cast %93 : vector<4x8xf32> to vector<4x8x1xf32>
    %95 = vector.broadcast %94 : vector<4x8x1xf32> to vector<4x8x8xf32>
    %96 = arith.subf %92, %95 : vector<4x8x8xf32>
    %97 = math.exp %96 : vector<4x8x8xf32>
    %cst_22 = arith.constant dense<0.000000e+00> : vector<4x8xf32>
    %98 = vector.multi_reduction <add>, %97, %cst_22 [2] : vector<4x8x8xf32> to vector<4x8xf32>
    %99 = vector.shape_cast %98 : vector<4x8xf32> to vector<4x8x1xf32>
    %100 = tpu.reciprocal %99 {approx = true} : vector<4x8x1xf32> -> vector<4x8x1xf32>
    %101 = vector.broadcast %100 : vector<4x8x1xf32> to vector<4x8x8xf32>
    %102 = arith.mulf %97, %101 : vector<4x8x8xf32>
    %103 = arith.truncf %102 : vector<4x8x8xf32> to vector<4x8x8xbf16>
    %104 = arith.truncf %61 : vector<4x8x8xf32> to vector<4x8x8xbf16>
    "tpu.trace_start"() <{level = 10 : i32, message = "hqk,hkd->hqd"}> : () -> ()
    %cst_23 = arith.constant dense<0.000000e+00> : vector<4x8x8xf32>
    %105 = tpu.matmul %103, %104, %cst_23 {dimension_numbers = #tpu.dot_dimension_numbers<[2], [1], [1], [2], [0, 0, 0, 1, 1, 2], [0], [0]>} : vector<4x8x8xbf16>, vector<4x8x8xbf16>, vector<4x8x8xf32> -> vector<4x8x8xf32>
    "tpu.trace_stop"() : () -> ()
    %106 = vector.extract_strided_slice %105 {offsets = [0, 0, 0], sizes = [1, 8, 8], strides = [1, 1, 1]} : vector<4x8x8xf32> to vector<1x8x8xf32>
    %107 = vector.shape_cast %106 : vector<1x8x8xf32> to vector<8x8xf32>
    %108 = vector.extract_strided_slice %105 {offsets = [1, 0, 0], sizes = [1, 8, 8], strides = [1, 1, 1]} : vector<4x8x8xf32> to vector<1x8x8xf32>
    %109 = vector.shape_cast %108 : vector<1x8x8xf32> to vector<8x8xf32>
    %110 = vector.extract_strided_slice %105 {offsets = [2, 0, 0], sizes = [1, 8, 8], strides = [1, 1, 1]} : vector<4x8x8xf32> to vector<1x8x8xf32>
    %111 = vector.shape_cast %110 : vector<1x8x8xf32> to vector<8x8xf32>
    %112 = vector.extract_strided_slice %105 {offsets = [3, 0, 0], sizes = [1, 8, 8], strides = [1, 1, 1]} : vector<4x8x8xf32> to vector<1x8x8xf32>
    %113 = vector.shape_cast %112 : vector<1x8x8xf32> to vector<8x8xf32>
    %114 = tpu.concatenate %107, %109, %111, %113 in 1 : vector<8x8xf32>, vector<8x8xf32>, vector<8x8xf32>, vector<8x8xf32> -> vector<8x32xf32>
    %115 = arith.truncf %114 : vector<8x32xf32> to vector<8x32xbf16>
    %c0_24 = arith.constant 0 : index
    %c0_25 = arith.constant 0 : index
    %116 = vector.load %arg6[%c0_24, %c0_25] : memref<32x32xbf16, #tpu.memory_space<vmem>>, vector<32x32xbf16>
    %cst_26 = arith.constant dense<0.000000e+00> : vector<8x32xf32>
    %117 = tpu.matmul %115, %116, %cst_26 {dimension_numbers = #tpu.dot_dimension_numbers<[1], [0], [0], [1], [0, 0, 1, 1], [], []>} : vector<8x32xbf16>, vector<32x32xbf16>, vector<8x32xf32> -> vector<8x32xf32>
    %c0_27 = arith.constant 0 : index
    %c0_28 = arith.constant 0 : index
    %118 = vector.load %arg7[%c0_27, %c0_28] : memref<1x32xf32, #tpu.memory_space<vmem>>, vector<1x32xf32>
    %119 = vector.broadcast %118 : vector<1x32xf32> to vector<8x32xf32>
    %120 = arith.addf %117, %119 : vector<8x32xf32>
    %121 = arith.addf %1, %120 : vector<8x32xf32>
    %c0_29 = arith.constant 0 : index
    %c0_30 = arith.constant 0 : index
    %122 = vector.load %arg8[%c0_29, %c0_30] : memref<1x32xf32, #tpu.memory_space<vmem>>, vector<1x32xf32>
    %c0_31 = arith.constant 0 : index
    %c0_32 = arith.constant 0 : index
    %123 = vector.load %arg9[%c0_31, %c0_32] : memref<1x32xf32, #tpu.memory_space<vmem>>, vector<1x32xf32>
    %cst_33 = arith.constant dense<0.000000e+00> : vector<8xf32>
    %124 = vector.multi_reduction <add>, %121, %cst_33 [1] : vector<8x32xf32> to vector<8xf32>
    %125 = vector.shape_cast %124 : vector<8xf32> to vector<8x1xf32>
    %cst_34 = arith.constant 3.200000e+01 : f32
    %126 = vector.broadcast %cst_34 : f32 to vector<8x1xf32>
    %127 = arith.divf %125, %126 : vector<8x1xf32>
    %128 = vector.broadcast %127 : vector<8x1xf32> to vector<8x32xf32>
    %129 = arith.subf %121, %128 : vector<8x32xf32>
    %130 = arith.mulf %129, %129 : vector<8x32xf32>
    %cst_35 = arith.constant dense<0.000000e+00> : vector<8xf32>
    %131 = vector.multi_reduction <add>, %130, %cst_35 [1] : vector<8x32xf32> to vector<8xf32>
    %132 = vector.shape_cast %131 : vector<8xf32> to vector<8x1xf32>
    %cst_36 = arith.constant 3.200000e+01 : f32
    %133 = vector.broadcast %cst_36 : f32 to vector<8x1xf32>
    %134 = arith.divf %132, %133 : vector<8x1xf32>
    %135 = vector.broadcast %127 : vector<8x1xf32> to vector<8x32xf32>
    %136 = arith.subf %121, %135 : vector<8x32xf32>
    %cst_37 = arith.constant 9.99999974E-6 : f32
    %137 = vector.broadcast %cst_37 : f32 to vector<8x1xf32>
    %138 = arith.addf %134, %137 : vector<8x1xf32>
    %139 = math.rsqrt %138 : vector<8x1xf32>
    %140 = vector.broadcast %139 : vector<8x1xf32> to vector<8x32xf32>
    %141 = arith.mulf %136, %140 : vector<8x32xf32>
    %142 = vector.broadcast %122 : vector<1x32xf32> to vector<8x32xf32>
    %143 = arith.mulf %141, %142 : vector<8x32xf32>
    %144 = vector.broadcast %123 : vector<1x32xf32> to vector<8x32xf32>
    %145 = arith.addf %143, %144 : vector<8x32xf32>
    %146 = arith.truncf %145 : vector<8x32xf32> to vector<8x32xbf16>
    %c0_38 = arith.constant 0 : index
    %c0_39 = arith.constant 0 : index
    %147 = vector.load %arg10[%c0_38, %c0_39] : memref<32x128xbf16, #tpu.memory_space<vmem>>, vector<32x128xbf16>
    %cst_40 = arith.constant dense<0.000000e+00> : vector<8x128xf32>
    %148 = tpu.matmul %146, %147, %cst_40 {dimension_numbers = #tpu.dot_dimension_numbers<[1], [0], [0], [1], [0, 0, 1, 1], [], []>} : vector<8x32xbf16>, vector<32x128xbf16>, vector<8x128xf32> -> vector<8x128xf32>
    %c0_41 = arith.constant 0 : index
    %c0_42 = arith.constant 0 : index
    %149 = vector.load %arg11[%c0_41, %c0_42] : memref<1x128xf32, #tpu.memory_space<vmem>>, vector<1x128xf32>
    %150 = vector.broadcast %149 : vector<1x128xf32> to vector<8x128xf32>
    %151 = arith.addf %148, %150 : vector<8x128xf32>
    %152 = arith.mulf %151, %151 : vector<8x128xf32>
    %153 = arith.mulf %151, %152 : vector<8x128xf32>
    %cst_43 = arith.constant 4.471500e-02 : f32
    %154 = vector.broadcast %cst_43 : f32 to vector<8x128xf32>
    %155 = arith.mulf %154, %153 : vector<8x128xf32>
    %156 = arith.addf %151, %155 : vector<8x128xf32>
    %cst_44 = arith.constant 0.797884583 : f32
    %157 = vector.broadcast %cst_44 : f32 to vector<8x128xf32>
    %158 = arith.mulf %157, %156 : vector<8x128xf32>
    %159 = math.tanh %158 : vector<8x128xf32>
    %cst_45 = arith.constant 1.000000e+00 : f32
    %160 = vector.broadcast %cst_45 : f32 to vector<8x128xf32>
    %161 = arith.addf %160, %159 : vector<8x128xf32>
    %cst_46 = arith.constant 5.000000e-01 : f32
    %162 = vector.broadcast %cst_46 : f32 to vector<8x128xf32>
    %163 = arith.mulf %162, %161 : vector<8x128xf32>
    %164 = arith.mulf %151, %163 : vector<8x128xf32>
    %165 = arith.truncf %164 : vector<8x128xf32> to vector<8x128xbf16>
    %c0_47 = arith.constant 0 : index
    %c0_48 = arith.constant 0 : index
    %166 = vector.load %arg12[%c0_47, %c0_48] : memref<128x32xbf16, #tpu.memory_space<vmem>>, vector<128x32xbf16>
    %cst_49 = arith.constant dense<0.000000e+00> : vector<8x32xf32>
    %167 = tpu.matmul %165, %166, %cst_49 {dimension_numbers = #tpu.dot_dimension_numbers<[1], [0], [0], [1], [0, 0, 1, 1], [], []>} : vector<8x128xbf16>, vector<128x32xbf16>, vector<8x32xf32> -> vector<8x32xf32>
    %c0_50 = arith.constant 0 : index
    %c0_51 = arith.constant 0 : index
    %168 = vector.load %arg13[%c0_50, %c0_51] : memref<1x32xf32, #tpu.memory_space<vmem>>, vector<1x32xf32>
    %169 = vector.broadcast %168 : vector<1x32xf32> to vector<8x32xf32>
    %170 = arith.addf %167, %169 : vector<8x32xf32>
    %171 = arith.addf %121, %170 : vector<8x32xf32>
    %c0_52 = arith.constant 0 : index
    %c0_53 = arith.constant 0 : index
    %c0_54 = arith.constant 0 : index
    %172 = vector.load %arg16[%c0_52, %c0_53, %c0_54] : memref<1x8x32xf32, #tpu.memory_space<vmem>>, vector<1x8x32xf32>
    %173 = vector.shape_cast %172 : vector<1x8x32xf32> to vector<8x32xf32>
    %174 = vector.shape_cast %171 : vector<8x32xf32> to vector<1x8x32xf32>
    tpu.vector_store %arg16[%c0_52, %c0_53, %c0_54], %174 {strides = array<i32>} : memref<1x8x32xf32, #tpu.memory_space<vmem>>, vector<1x8x32xf32>,
    return
  }
  func.func @transform_0(%arg0: i32) -> (i32, i32, i32) {
    %c0_i32 = arith.constant 0 : i32
    %c0_i32_0 = arith.constant 0 : i32
    %c0_i32_1 = arith.constant 0 : i32
    return %arg0, %c0_i32, %c0_i32_0 : i32, i32, i32
  }
  func.func @transform_1(%arg0: i32) -> (i32, i32) {
    %c0_i32 = arith.constant 0 : i32
    %c0_i32_0 = arith.constant 0 : i32
    %c0_i32_1 = arith.constant 0 : i32
    return %c0_i32, %c0_i32_0 : i32, i32
  }
  func.func @transform_2(%arg0: i32) -> (i32, i32) {
    %c0_i32 = arith.constant 0 : i32
    %c0_i32_0 = arith.constant 0 : i32
    %c0_i32_1 = arith.constant 0 : i32
    return %c0_i32, %c0_i32_0 : i32, i32
  }
  func.func @transform_3(%arg0: i32) -> (i32, i32) {
    %c0_i32 = arith.constant 0 : i32
    %c0_i32_0 = arith.constant 0 : i32
    %c0_i32_1 = arith.constant 0 : i32
    return %c0_i32, %c0_i32_0 : i32, i32
  }
  func.func @transform_4(%arg0: i32) -> (i32, i32) {
    %c0_i32 = arith.constant 0 : i32
    %c0_i32_0 = arith.constant 0 : i32
    %c0_i32_1 = arith.constant 0 : i32
    return %c0_i32, %c0_i32_0 : i32, i32
  }
  func.func @transform_5(%arg0: i32) -> (i32, i32) {
    %c0_i32 = arith.constant 0 : i32
    %c0_i32_0 = arith.constant 0 : i32
    %c0_i32_1 = arith.constant 0 : i32
    return %c0_i32, %c0_i32_0 : i32, i32
  }
  func.func @transform_6(%arg0: i32) -> (i32, i32) {
    %c0_i32 = arith.constant 0 : i32
    %c0_i32_0 = arith.constant 0 : i32
    %c0_i32_1 = arith.constant 0 : i32
    return %c0_i32, %c0_i32_0 : i32, i32
  }
  func.func @transform_7(%arg0: i32) -> (i32, i32) {
    %c0_i32 = arith.constant 0 : i32
    %c0_i32_0 = arith.constant 0 : i32
    %c0_i32_1 = arith.constant 0 : i32
    return %c0_i32, %c0_i32_0 : i32, i32
  }
  func.func @transform_8(%arg0: i32) -> (i32, i32) {
    %c0_i32 = arith.constant 0 : i32
    %c0_i32_0 = arith.constant 0 : i32
    %c0_i32_1 = arith.constant 0 : i32
    return %c0_i32, %c0_i32_0 : i32, i32
  }
  func.func @transform_9(%arg0: i32) -> (i32, i32) {
    %c0_i32 = arith.constant 0 : i32
    %c0_i32_0 = arith.constant 0 : i32
    %c0_i32_1 = arith.constant 0 : i32
    return %c0_i32, %c0_i32_0 : i32, i32
  }
  func.func @transform_10(%arg0: i32) -> (i32, i32) {
    %c0_i32 = arith.constant 0 : i32
    %c0_i32_0 = arith.constant 0 : i32
    %c0_i32_1 = arith.constant 0 : i32
    return %c0_i32, %c0_i32_0 : i32, i32
  }
  func.func @transform_11(%arg0: i32) -> (i32, i32) {
    %c0_i32 = arith.constant 0 : i32
    %c0_i32_0 = arith.constant 0 : i32
    %c0_i32_1 = arith.constant 0 : i32
    return %c0_i32, %c0_i32_0 : i32, i32
  }
  func.func @transform_12(%arg0: i32) -> (i32, i32) {
    %c0_i32 = arith.constant 0 : i32
    %c0_i32_0 = arith.constant 0 : i32
    %c0_i32_1 = arith.constant 0 : i32
    return %c0_i32, %c0_i32_0 : i32, i32
  }
  func.func @transform_13(%arg0: i32) -> (i32, i32) {
    %c0_i32 = arith.constant 0 : i32
    %c0_i32_0 = arith.constant 0 : i32
    %c0_i32_1 = arith.constant 0 : i32
    return %c0_i32, %c0_i32_0 : i32, i32
  }
  func.func @transform_14(%arg0: i32) -> (i32, i32) {
    %c0_i32 = arith.constant 0 : i32
    %c0_i32_0 = arith.constant 0 : i32
    %c0_i32_1 = arith.constant 0 : i32
    return %c0_i32, %c0_i32_0 : i32, i32
  }
  func.func @transform_15(%arg0: i32) -> (i32, i32, i32) {
    %c0_i32 = arith.constant 0 : i32
    %c0_i32_0 = arith.constant 0 : i32
    %c0_i32_1 = arith.constant 0 : i32
    return %arg0, %c0_i32, %c0_i32_0 : i32, i32, i32
  }
}

</mosaic_0001>

<llo_original>
// kernel: tpu_custom_call.1
$region0: #{tpu_custom_call.1}
  #allocation0 [shape = 'u32[]', space=smem, size = 0x4, offset = 0x4, fixed_abs, tag = 'smem constant byte address 0x4 - core index']
  #allocation1 [shape = 'u32[144,128]{1,0:T(1,128)}', space=vmem, size = 0x12000, scoped, tag = 'internal scratch']
  %s0 = inlined_call_operand.vmem [shape: f32[2,8,32], index: 0, kind: input, shape index: {}]
  %s1 = inlined_call_operand.vmem [shape: f32[1,32], index: 1, kind: input, shape index: {}]
  %s2 = inlined_call_operand.vmem [shape: f32[1,32], index: 2, kind: input, shape index: {}]
  %s3 = inlined_call_operand.vmem [shape: bf16[32,96], index: 3, kind: input, shape index: {}]
  %s4 = inlined_call_operand.vmem [shape: f32[1,96], index: 4, kind: input, shape index: {}]
  %s5 = inlined_call_operand.vmem [shape: bf16[32,32], index: 5, kind: input, shape index: {}]
  %s6 = inlined_call_operand.vmem [shape: f32[1,32], index: 6, kind: input, shape index: {}]
  %s7 = inlined_call_operand.vmem [shape: f32[1,32], index: 7, kind: input, shape index: {}]
  %s8 = inlined_call_operand.vmem [shape: f32[1,32], index: 8, kind: input, shape index: {}]
  %s9 = inlined_call_operand.vmem [shape: bf16[32,128], index: 9, kind: input, shape index: {}]
  %s10 = inlined_call_operand.vmem [shape: f32[1,128], index: 10, kind: input, shape index: {}]
  %s11 = inlined_call_operand.vmem [shape: bf16[128,32], index: 11, kind: input, shape index: {}]
  %s12 = inlined_call_operand.vmem [shape: f32[1,32], index: 12, kind: input, shape index: {}]
  %s13 = inlined_call_operand.vmem [shape: f32[8,8], index: 13, kind: input, shape index: {}]
  %s14 = inlined_call_operand.vmem [shape: f32[8,8], index: 14, kind: input, shape index: {}]
  %s15 = inlined_call_operand.hbm [shape: f32[2,8,32], index: 15, kind: output, shape index: {}]
  %s16 = sld [smem:[#allocation0]]
  $region93: #{tpu_custom_call.1} parent=0
    _
  %s18 = ssub.s32 1, %s16
  %s19 = scalar_select 0, %s18, %s16
  $region1: #{tpu_custom_call.1} parent=0
    #allocation2 [shape = 'u8[8192]{0}', space=vmem, size = 0x2000, scoped, tag = 'output window, operand 0']
    #allocation3 [shape = 's32[2]{0}', space=sflag, size = 0x8, scoped, tag = 'scoped memory for tpu_custom_call.1']
    %20 = vsyncpa [#allocation3], 0
    %s21 = scalar_lea.sflag [#allocation3], 1
    %22 = vsyncpa %s21, 0
    loop: start=0, step=1, limit=4
    $region2: #{tpu_custom_call.1} parent=1 // loop_pre_header
      _
    $region3: #{tpu_custom_call.1} parent=1 // loop_header
      %s24 = sphi 0, %s28
      %p25 = scmp.ge.s32.totalorder %s24, 4
      %s34 = sphi 0, %s36
      %s37 = sphi 0, %s34
      %s38 = sphi 0, %s37
      %s54 = sphi 0, %s38
      %s58 = sphi 0, %s58
      %s60 = sphi 0, %s58
      %s61 = sphi 0, %s60
      %s75 = sphi 0, %s61
      %s79 = sphi 0, %s79
      %s81 = sphi 0, %s79
      %s82 = sphi 0, %s81
      %s96 = sphi 0, %s82
      %s100 = sphi 0, %s100
      %s102 = sphi 0, %s100
      %s103 = sphi 0, %s102
      %s117 = sphi 0, %s103
      %s121 = sphi 0, %s121
      %s123 = sphi 0, %s121
      %s124 = sphi 0, %s123
      %s138 = sphi 0, %s124
      %s142 = sphi 0, %s142
      %s144 = sphi 0, %s142
      %s145 = sphi 0, %s144
      %s159 = sphi 0, %s145
      %s163 = sphi 0, %s163
      %s165 = sphi 0, %s163
      %s166 = sphi 0, %s165
      %s180 = sphi 0, %s166
      %s184 = sphi 0, %s184
      %s186 = sphi 0, %s184
      %s187 = sphi 0, %s186
      %s201 = sphi 0, %s187
      %s205 = sphi 0, %s205
      %s207 = sphi 0, %s205
      %s208 = sphi 0, %s207
      %s222 = sphi 0, %s208
      %s226 = sphi 0, %s226
      %s228 = sphi 0, %s226
      %s229 = sphi 0, %s228
      %s243 = sphi 0, %s229
      %s247 = sphi 0, %s247
      %s249 = sphi 0, %s247
      %s250 = sphi 0, %s249
      %s264 = sphi 0, %s250
      %s268 = sphi 0, %s268
      %s270 = sphi 0, %s268
      %s271 = sphi 0, %s270
      %s285 = sphi 0, %s271
      %s289 = sphi 0, %s289
      %s291 = sphi 0, %s289
      %s292 = sphi 0, %s291
      %s306 = sphi 0, %s292
      %s310 = sphi 0, %s310
      %s312 = sphi 0, %s310
      %s313 = sphi 0, %s312
      %s327 = sphi 0, %s313
      %s331 = sphi 0, %s331
      %s333 = sphi 0, %s331
      %s334 = sphi 0, %s333
      %s348 = sphi 0, %s334
      %s354 = sphi 0, %s356
      %s357 = sphi 0, %s354
      %s358 = sphi 0, %s357
      %s374 = sphi 0, %s358
    $region4: #{tpu_custom_call.1} parent=1 // loop_header_branch
      %27 = sbr.rel (%p25) target = $region8
    $region5: #{tpu_custom_call.1} parent=1 // loop_body
      %s29 = ssub.s32 %s24, 1
      %s30 = ssub.s32 %s24, 2
      %s31 = sadd.s32 %s24, 1
      %s32 = ssub.s32 %s24, %s31
      %p33 = scmp.eq.s32.totalorder %s32, 0
      %s35 = sadd.s32 %s34, 1
      %s36 = scalar_select %p33, %s34, %s35
      %p39 = pneg %p33
      %p40 = scmp.eq.s32.totalorder %s24, 1
      %p41 = por %p39, %p40
      %p42 = scmp.ne.s32.totalorder %s34, %s37
      %p43 = scmp.eq.s32.totalorder %s24, 0
      %p44 = por %p42, %p43
      %p45 = scmp.ne.s32.totalorder %s34, %s37
      %p46 = scmp.eq.s32.totalorder %s29, 1
      %p47 = por %p45, %p46
      %p48 = scmp.ne.s32.totalorder %s37, %s38
      %p49 = scmp.eq.s32.totalorder %s29, 0
      %p50 = por %p48, %p49
      %p51 = scmp.ne.s32.totalorder %s37, %s38
      %p52 = scmp.eq.s32.totalorder %s30, 1
      %p53 = por %p51, %p52
      %p55 = scmp.ne.s32.totalorder %s38, %s54
      %p56 = scmp.eq.s32.totalorder %s30, 0
      %p57 = por %p55, %p56
      %s59 = sadd.s32 %s58, 1
      %p62 = scmp.eq.s32.totalorder %s24, 1
      %p63 = scmp.ne.s32.totalorder %s58, %s60
      %p64 = scmp.eq.s32.totalorder %s24, 0
      %p65 = por %p63, %p64
      %p66 = scmp.ne.s32.totalorder %s58, %s60
      %p67 = scmp.eq.s32.totalorder %s29, 1
      %p68 = por %p66, %p67
      %p69 = scmp.ne.s32.totalorder %s60, %s61
      %p70 = scmp.eq.s32.totalorder %s29, 0
      %p71 = por %p69, %p70
      %p72 = scmp.ne.s32.totalorder %s60, %s61
      %p73 = scmp.eq.s32.totalorder %s30, 1
      %p74 = por %p72, %p73
      %p76 = scmp.ne.s32.totalorder %s61, %s75
      %p77 = scmp.eq.s32.totalorder %s30, 0
      %p78 = por %p76, %p77
      %s80 = sadd.s32 %s79, 1
      %p83 = scmp.eq.s32.totalorder %s24, 1
      %p84 = scmp.ne.s32.totalorder %s79, %s81
      %p85 = scmp.eq.s32.totalorder %s24, 0
      %p86 = por %p84, %p85
      %p87 = scmp.ne.s32.totalorder %s79, %s81
      %p88 = scmp.eq.s32.totalorder %s29, 1
      %p89 = por %p87, %p88
      %p90 = scmp.ne.s32.totalorder %s81, %s82
      %p91 = scmp.eq.s32.totalorder %s29, 0
      %p92 = por %p90, %p91
      %p93 = scmp.ne.s32.totalorder %s81, %s82
      %p94 = scmp.eq.s32.totalorder %s30, 1
      %p95 = por %p93, %p94
      %p97 = scmp.ne.s32.totalorder %s82, %s96
      %p98 = scmp.eq.s32.totalorder %s30, 0
      %p99 = por %p97, %p98
      %s101 = sadd.s32 %s100, 1
      %p104 = scmp.eq.s32.totalorder %s24, 1
      %p105 = scmp.ne.s32.totalorder %s100, %s102
      %p106 = scmp.eq.s32.totalorder %s24, 0
      %p107 = por %p105, %p106
      %p108 = scmp.ne.s32.totalorder %s100, %s102
      %p109 = scmp.eq.s32.totalorder %s29, 1
      %p110 = por %p108, %p109
      %p111 = scmp.ne.s32.totalorder %s102, %s103
      %p112 = scmp.eq.s32.totalorder %s29, 0
      %p113 = por %p111, %p112
      %p114 = scmp.ne.s32.totalorder %s102, %s103
      %p115 = scmp.eq.s32.totalorder %s30, 1
      %p116 = por %p114, %p115
      %p118 = scmp.ne.s32.totalorder %s103, %s117
      %p119 = scmp.eq.s32.totalorder %s30, 0
      %p120 = por %p118, %p119
      %s122 = sadd.s32 %s121, 1
      %p125 = scmp.eq.s32.totalorder %s24, 1
      %p126 = scmp.ne.s32.totalorder %s121, %s123
      %p127 = scmp.eq.s32.totalorder %s24, 0
      %p128 = por %p126, %p127
      %p129 = scmp.ne.s32.totalorder %s121, %s123
      %p130 = scmp.eq.s32.totalorder %s29, 1
      %p131 = por %p129, %p130
      %p132 = scmp.ne.s32.totalorder %s123, %s124
      %p133 = scmp.eq.s32.totalorder %s29, 0
      %p134 = por %p132, %p133
      %p135 = scmp.ne.s32.totalorder %s123, %s124
      %p136 = scmp.eq.s32.totalorder %s30, 1
      %p137 = por %p135, %p136
      %p139 = scmp.ne.s32.totalorder %s124, %s138
      %p140 = scmp.eq.s32.totalorder %s30, 0
      %p141 = por %p139, %p140
      %s143 = sadd.s32 %s142, 1
      %p146 = scmp.eq.s32.totalorder %s24, 1
      %p147 = scmp.ne.s32.totalorder %s142, %s144
      %p148 = scmp.eq.s32.totalorder %s24, 0
      %p149 = por %p147, %p148
      %p150 = scmp.ne.s32.totalorder %s142, %s144
      %p151 = scmp.eq.s32.totalorder %s29, 1
      %p152 = por %p150, %p151
      %p153 = scmp.ne.s32.totalorder %s144, %s145
      %p154 = scmp.eq.s32.totalorder %s29, 0
      %p155 = por %p153, %p154
      %p156 = scmp.ne.s32.totalorder %s144, %s145
      %p157 = scmp.eq.s32.totalorder %s30, 1
      %p158 = por %p156, %p157
      %p160 = scmp.ne.s32.totalorder %s145, %s159
      %p161 = scmp.eq.s32.totalorder %s30, 0
      %p162 = por %p160, %p161
      %s164 = sadd.s32 %s163, 1
      %p167 = scmp.eq.s32.totalorder %s24, 1
      %p168 = scmp.ne.s32.totalorder %s163, %s165
      %p169 = scmp.eq.s32.totalorder %s24, 0
      %p170 = por %p168, %p169
      %p171 = scmp.ne.s32.totalorder %s163, %s165
      %p172 = scmp.eq.s32.totalorder %s29, 1
      %p173 = por %p171, %p172
      %p174 = scmp.ne.s32.totalorder %s165, %s166
      %p175 = scmp.eq.s32.totalorder %s29, 0
      %p176 = por %p174, %p175
      %p177 = scmp.ne.s32.totalorder %s165, %s166
      %p178 = scmp.eq.s32.totalorder %s30, 1
      %p179 = por %p177, %p178
      %p181 = scmp.ne.s32.totalorder %s166, %s180
      %p182 = scmp.eq.s32.totalorder %s30, 0
      %p183 = por %p181, %p182
      %s185 = sadd.s32 %s184, 1
      %p188 = scmp.eq.s32.totalorder %s24, 1
      %p189 = scmp.ne.s32.totalorder %s184, %s186
      %p190 = scmp.eq.s32.totalorder %s24, 0
      %p191 = por %p189, %p190
      %p192 = scmp.ne.s32.totalorder %s184, %s186
      %p193 = scmp.eq.s32.totalorder %s29, 1
      %p194 = por %p192, %p193
      %p195 = scmp.ne.s32.totalorder %s186, %s187
      %p196 = scmp.eq.s32.totalorder %s29, 0
      %p197 = por %p195, %p196
      %p198 = scmp.ne.s32.totalorder %s186, %s187
      %p199 = scmp.eq.s32.totalorder %s30, 1
      %p200 = por %p198, %p199
      %p202 = scmp.ne.s32.totalorder %s187, %s201
      %p203 = scmp.eq.s32.totalorder %s30, 0
      %p204 = por %p202, %p203
      %s206 = sadd.s32 %s205, 1
      %p209 = scmp.eq.s32.totalorder %s24, 1
      %p210 = scmp.ne.s32.totalorder %s205, %s207
      %p211 = scmp.eq.s32.totalorder %s24, 0
      %p212 = por %p210, %p211
      %p213 = scmp.ne.s32.totalorder %s205, %s207
      %p214 = scmp.eq.s32.totalorder %s29, 1
      %p215 = por %p213, %p214
      %p216 = scmp.ne.s32.totalorder %s207, %s208
      %p217 = scmp.eq.s32.totalorder %s29, 0
      %p218 = por %p216, %p217
      %p219 = scmp.ne.s32.totalorder %s207, %s208
      %p220 = scmp.eq.s32.totalorder %s30, 1
      %p221 = por %p219, %p220
      %p223 = scmp.ne.s32.totalorder %s208, %s222
      %p224 = scmp.eq.s32.totalorder %s30, 0
      %p225 = por %p223, %p224
      %s227 = sadd.s32 %s226, 1
      %p230 = scmp.eq.s32.totalorder %s24, 1
      %p231 = scmp.ne.s32.totalorder %s226, %s228
      %p232 = scmp.eq.s32.totalorder %s24, 0
      %p233 = por %p231, %p232
      %p234 = scmp.ne.s32.totalorder %s226, %s228
      %p235 = scmp.eq.s32.totalorder %s29, 1
      %p236 = por %p234, %p235
      %p237 = scmp.ne.s32.totalorder %s228, %s229
      %p238 = scmp.eq.s32.totalorder %s29, 0
      %p239 = por %p237, %p238
      %p240 = scmp.ne.s32.totalorder %s228, %s229
      %p241 = scmp.eq.s32.totalorder %s30, 1
      %p242 = por %p240, %p241
      %p244 = scmp.ne.s32.totalorder %s229, %s243
      %p245 = scmp.eq.s32.totalorder %s30, 0
      %p246 = por %p244, %p245
      %s248 = sadd.s32 %s247, 1
      %p251 = scmp.eq.s32.totalorder %s24, 1
      %p252 = scmp.ne.s32.totalorder %s247, %s249
      %p253 = scmp.eq.s32.totalorder %s24, 0
      %p254 = por %p252, %p253
      %p255 = scmp.ne.s32.totalorder %s247, %s249
      %p256 = scmp.eq.s32.totalorder %s29, 1
      %p257 = por %p255, %p256
      %p258 = scmp.ne.s32.totalorder %s249, %s250
      %p259 = scmp.eq.s32.totalorder %s29, 0
      %p260 = por %p258, %p259
      %p261 = scmp.ne.s32.totalorder %s249, %s250
      %p262 = scmp.eq.s32.totalorder %s30, 1
      %p263 = por %p261, %p262
      %p265 = scmp.ne.s32.totalorder %s250, %s264
      %p266 = scmp.eq.s32.totalorder %s30, 0
      %p267 = por %p265, %p266
      %s269 = sadd.s32 %s268, 1
      %p272 = scmp.eq.s32.totalorder %s24, 1
      %p273 = scmp.ne.s32.totalorder %s268, %s270
      %p274 = scmp.eq.s32.totalorder %s24, 0
      %p275 = por %p273, %p274
      %p276 = scmp.ne.s32.totalorder %s268, %s270
      %p277 = scmp.eq.s32.totalorder %s29, 1
      %p278 = por %p276, %p277
      %p279 = scmp.ne.s32.totalorder %s270, %s271
      %p280 = scmp.eq.s32.totalorder %s29, 0
      %p281 = por %p279, %p280
      %p282 = scmp.ne.s32.totalorder %s270, %s271
      %p283 = scmp.eq.s32.totalorder %s30, 1
      %p284 = por %p282, %p283
      %p286 = scmp.ne.s32.totalorder %s271, %s285
      %p287 = scmp.eq.s32.totalorder %s30, 0
      %p288 = por %p286, %p287
      %s290 = sadd.s32 %s289, 1
      %p293 = scmp.eq.s32.totalorder %s24, 1
      %p294 = scmp.ne.s32.totalorder %s289, %s291
      %p295 = scmp.eq.s32.totalorder %s24, 0
      %p296 = por %p294, %p295
      %p297 = scmp.ne.s32.totalorder %s289, %s291
      %p298 = scmp.eq.s32.totalorder %s29, 1
      %p299 = por %p297, %p298
      %p300 = scmp.ne.s32.totalorder %s291, %s292
      %p301 = scmp.eq.s32.totalorder %s29, 0
      %p302 = por %p300, %p301
      %p303 = scmp.ne.s32.totalorder %s291, %s292
      %p304 = scmp.eq.s32.totalorder %s30, 1
      %p305 = por %p303, %p304
      %p307 = scmp.ne.s32.totalorder %s292, %s306
      %p308 = scmp.eq.s32.totalorder %s30, 0
      %p309 = por %p307, %p308
      %s311 = sadd.s32 %s310, 1
      %p314 = scmp.eq.s32.totalorder %s24, 1
      %p315 = scmp.ne.s32.totalorder %s310, %s312
      %p316 = scmp.eq.s32.totalorder %s24, 0
      %p317 = por %p315, %p316
      %p318 = scmp.ne.s32.totalorder %s310, %s312
      %p319 = scmp.eq.s32.totalorder %s29, 1
      %p320 = por %p318, %p319
      %p321 = scmp.ne.s32.totalorder %s312, %s313
      %p322 = scmp.eq.s32.totalorder %s29, 0
      %p323 = por %p321, %p322
      %p324 = scmp.ne.s32.totalorder %s312, %s313
      %p325 = scmp.eq.s32.totalorder %s30, 1
      %p326 = por %p324, %p325
      %p328 = scmp.ne.s32.totalorder %s313, %s327
      %p329 = scmp.eq.s32.totalorder %s30, 0
      %p330 = por %p328, %p329
      %s332 = sadd.s32 %s331, 1
      %p335 = scmp.eq.s32.totalorder %s24, 1
      %p336 = scmp.ne.s32.totalorder %s331, %s333
      %p337 = scmp.eq.s32.totalorder %s24, 0
      %p338 = por %p336, %p337
      %p339 = scmp.ne.s32.totalorder %s331, %s333
      %p340 = scmp.eq.s32.totalorder %s29, 1
      %p341 = por %p339, %p340
      %p342 = scmp.ne.s32.totalorder %s333, %s334
      %p343 = scmp.eq.s32.totalorder %s29, 0
      %p344 = por %p342, %p343
      %p345 = scmp.ne.s32.totalorder %s333, %s334
      %p346 = scmp.eq.s32.totalorder %s30, 1
      %p347 = por %p345, %p346
      %p349 = scmp.ne.s32.totalorder %s334, %s348
      %p350 = scmp.eq.s32.totalorder %s30, 0
      %p351 = por %p349, %p350
      %s352 = ssub.s32 %s24, %s31
      %p353 = scmp.eq.s32.totalorder %s352, 0
      %s355 = sadd.s32 %s354, 1
      %s356 = scalar_select %p353, %s354, %s355
      %p359 = pneg %p353
      %p360 = scmp.eq.s32.totalorder %s24, 1
      %p361 = por %p359, %p360
      %p362 = scmp.ne.s32.totalorder %s354, %s357
      %p363 = scmp.eq.s32.totalorder %s24, 0
      %p364 = por %p362, %p363
      %p365 = scmp.ne.s32.totalorder %s354, %s357
      %p366 = scmp.eq.s32.totalorder %s29, 1
      %p367 = por %p365, %p366
      %p368 = scmp.ne.s32.totalorder %s357, %s358
      %p369 = scmp.eq.s32.totalorder %s29, 0
      %p370 = por %p368, %p369
      %p371 = scmp.ne.s32.totalorder %s357, %s358
      %p372 = scmp.eq.s32.totalorder %s30, 1
      %p373 = por %p371, %p372
      %p375 = scmp.ne.s32.totalorder %s358, %s374
      %p376 = scmp.eq.s32.totalorder %s30, 0
      %p377 = por %p375, %p376
      %p378 = scmp.le.s32.totalorder 1, %s24
      %p379 = scmp.lt.s32.totalorder %s24, 3
      %p380 = pnand %p378, %p379
      %p381 = pneg %p380
      // Predicated region
      $region9: #{tpu_custom_call.1} parent=5 // pred_check
        _
      $region10: #{tpu_custom_call.1} parent=5 // pred_check_branch
        %383 = sbr.rel (%p380) target = $region12
      $region11: #{tpu_custom_call.1} parent=5 // pred_region
        %s384 = ssub.s32 %s24, 1
        // Predicated region
        $region13: #{tpu_custom_call.1} parent=11 // pred_check
          %p385 = pneg %p71
        $region14: #{tpu_custom_call.1} parent=11 // pred_check_branch
          %387 = sbr.rel (%p385) target = $region16
        $region15: #{tpu_custom_call.1} parent=11 // pred_region
          _
        $region16: #{tpu_custom_call.1} parent=11 // pred_fallthru
          _
        // Predicated region
        $region17: #{tpu_custom_call.1} parent=11 // pred_check
          %p388 = pneg %p92
        $region18: #{tpu_custom_call.1} parent=11 // pred_check_branch
          %390 = sbr.rel (%p388) target = $region20
        $region19: #{tpu_custom_call.1} parent=11 // pred_region
          _
        $region20: #{tpu_custom_call.1} parent=11 // pred_fallthru
          _
        // Predicated region
        $region21: #{tpu_custom_call.1} parent=11 // pred_check
          %p391 = pneg %p113
        $region22: #{tpu_custom_call.1} parent=11 // pred_check_branch
          %393 = sbr.rel (%p391) target = $region24
        $region23: #{tpu_custom_call.1} parent=11 // pred_region
          _
        $region24: #{tpu_custom_call.1} parent=11 // pred_fallthru
          _
        // Predicated region
        $region25: #{tpu_custom_call.1} parent=11 // pred_check
          %p394 = pneg %p134
        $region26: #{tpu_custom_call.1} parent=11 // pred_check_branch
          %396 = sbr.rel (%p394) target = $region28
        $region27: #{tpu_custom_call.1} parent=11 // pred_region
          _
        $region28: #{tpu_custom_call.1} parent=11 // pred_fallthru
          _
        // Predicated region
        $region29: #{tpu_custom_call.1} parent=11 // pred_check
          %p397 = pneg %p155
        $region30: #{tpu_custom_call.1} parent=11 // pred_check_branch
          %399 = sbr.rel (%p397) target = $region32
        $region31: #{tpu_custom_call.1} parent=11 // pred_region
          _
        $region32: #{tpu_custom_call.1} parent=11 // pred_fallthru
          _
        // Predicated region
        $region33: #{tpu_custom_call.1} parent=11 // pred_check
          %p400 = pneg %p176
        $region34: #{tpu_custom_call.1} parent=11 // pred_check_branch
          %402 = sbr.rel (%p400) target = $region36
        $region35: #{tpu_custom_call.1} parent=11 // pred_region
          _
        $region36: #{tpu_custom_call.1} parent=11 // pred_fallthru
          _
        // Predicated region
        $region37: #{tpu_custom_call.1} parent=11 // pred_check
          %p403 = pneg %p197
        $region38: #{tpu_custom_call.1} parent=11 // pred_check_branch
          %405 = sbr.rel (%p403) target = $region40
        $region39: #{tpu_custom_call.1} parent=11 // pred_region
          _
        $region40: #{tpu_custom_call.1} parent=11 // pred_fallthru
          _
        // Predicated region
        $region41: #{tpu_custom_call.1} parent=11 // pred_check
          %p406 = pneg %p218
        $region42: #{tpu_custom_call.1} parent=11 // pred_check_branch
          %408 = sbr.rel (%p406) target = $region44
        $region43: #{tpu_custom_call.1} parent=11 // pred_region
          _
        $region44: #{tpu_custom_call.1} parent=11 // pred_fallthru
          _
        // Predicated region
        $region45: #{tpu_custom_call.1} parent=11 // pred_check
          %p409 = pneg %p239
        $region46: #{tpu_custom_call.1} parent=11 // pred_check_branch
          %411 = sbr.rel (%p409) target = $region48
        $region47: #{tpu_custom_call.1} parent=11 // pred_region
          _
        $region48: #{tpu_custom_call.1} parent=11 // pred_fallthru
          _
        // Predicated region
        $region49: #{tpu_custom_call.1} parent=11 // pred_check
          %p412 = pneg %p260
        $region50: #{tpu_custom_call.1} parent=11 // pred_check_branch
          %414 = sbr.rel (%p412) target = $region52
        $region51: #{tpu_custom_call.1} parent=11 // pred_region
          _
        $region52: #{tpu_custom_call.1} parent=11 // pred_fallthru
          _
        // Predicated region
        $region53: #{tpu_custom_call.1} parent=11 // pred_check
          %p415 = pneg %p281
        $region54: #{tpu_custom_call.1} parent=11 // pred_check_branch
          %417 = sbr.rel (%p415) target = $region56
        $region55: #{tpu_custom_call.1} parent=11 // pred_region
          _
        $region56: #{tpu_custom_call.1} parent=11 // pred_fallthru
          _
        // Predicated region
        $region57: #{tpu_custom_call.1} parent=11 // pred_check
          %p418 = pneg %p302
        $region58: #{tpu_custom_call.1} parent=11 // pred_check_branch
          %420 = sbr.rel (%p418) target = $region60
        $region59: #{tpu_custom_call.1} parent=11 // pred_region
          _
        $region60: #{tpu_custom_call.1} parent=11 // pred_fallthru
          _
        // Predicated region
        $region61: #{tpu_custom_call.1} parent=11 // pred_check
          %p421 = pneg %p323
        $region62: #{tpu_custom_call.1} parent=11 // pred_check_branch
          %423 = sbr.rel (%p421) target = $region64
        $region63: #{tpu_custom_call.1} parent=11 // pred_region
          _
        $region64: #{tpu_custom_call.1} parent=11 // pred_fallthru
          _
        // Predicated region
        $region65: #{tpu_custom_call.1} parent=11 // pred_check
          %p424 = pneg %p344
        $region66: #{tpu_custom_call.1} parent=11 // pred_check_branch
          %426 = sbr.rel (%p424) target = $region68
        $region67: #{tpu_custom_call.1} parent=11 // pred_region
          _
        $region68: #{tpu_custom_call.1} parent=11 // pred_fallthru
          _
      $region12: #{tpu_custom_call.1} parent=5 // pred_fallthru
        _
      %p427 = scmp.lt.s32.totalorder %s24, 2
      // Predicated region
      $region69: #{tpu_custom_call.1} parent=5 // pred_check
        %p428 = pneg %p427
      $region70: #{tpu_custom_call.1} parent=5 // pred_check_branch
        %430 = sbr.rel (%p428) target = $region72
      $region71: #{tpu_custom_call.1} parent=5 // pred_region
        // Predicated region
        $region73: #{tpu_custom_call.1} parent=71 // pred_check
          %p431 = pneg %p44
        $region74: #{tpu_custom_call.1} parent=71 // pred_check_branch
          %433 = sbr.rel (%p431) target = $region76
        $region75: #{tpu_custom_call.1} parent=71 // pred_region
          %p434 = scmp.lt.s32.totalorder %s24, 1
          %s435 = scalar_select %p434, %s24, 1
          %s436 = smul.addr %s435, 8
          %s437 = scalar_lea.vmem %s0, %s436
        $region76: #{tpu_custom_call.1} parent=71 // pred_fallthru
          _
      $region72: #{tpu_custom_call.1} parent=5 // pred_fallthru
        _
      %p438 = scmp.le.s32.totalorder 1, %s24
      %p439 = scmp.lt.s32.totalorder %s24, 3
      %p440 = pnand %p438, %p439
      %p441 = pneg %p440
      // Predicated region
      $region77: #{tpu_custom_call.1} parent=5 // pred_check
        _
      $region78: #{tpu_custom_call.1} parent=5 // pred_check_branch
        %443 = sbr.rel (%p440) target = $region80
      $region79: #{tpu_custom_call.1} parent=5 // pred_region
        %s444 = ssub.s32 %s24, 1
        %p445 = scmp.lt.s32.totalorder %s29, 1
        %s446 = scalar_select %p445, %s29, 1
        %s447 = smul.addr %s446, 8
        %s448 = scalar_lea.vmem %s0, %s447
        %p449 = pneg %p50
        %p450 = pneg %p47
        %p451 = pneg %p71
        %p452 = pneg %p68
        %p453 = pneg %p92
        %p454 = pneg %p89
        %p455 = pneg %p113
        %p456 = pneg %p110
        %p457 = pneg %p134
        %p458 = pneg %p131
        %p459 = pneg %p155
        %p460 = pneg %p152
        %p461 = pneg %p176
        %p462 = pneg %p173
        %p463 = pneg %p197
        %p464 = pneg %p194
        %p465 = pneg %p218
        %p466 = pneg %p215
        %p467 = pneg %p239
        %p468 = pneg %p236
        %p469 = pneg %p260
        %p470 = pneg %p257
        %p471 = pneg %p281
        %p472 = pneg %p278
        %p473 = pneg %p302
        %p474 = pneg %p299
        %p475 = pneg %p323
        %p476 = pneg %p320
        %p477 = pneg %p344
        %p478 = pneg %p341
        %p479 = pneg %p370
        %p480 = pneg %p367
        %s481 = sand.u32 %s357, 1
        %s482 = scalar_lea.sflag [#allocation3], %s481
        %s483 = sand.u32 %s357, 1
        %s484 = smul.addr %s483, 8
        %s485 = scalar_lea.vmem [#allocation2], %s484
        %p486 = scmp.lt.s32.totalorder %s29, 1
        %s487 = scalar_select %p486, %s29, 1
        %s488 = smul.addr %s487, 8
        %s489 = scalar_lea.vmem %s0, %s488
        %v491 = vld [vmem:[%s489] sm:$0xff]
        %v492 = vld [vmem:[%s1] sm:$0x1]
        %v493 = vld [vmem:[%s2] sm:$0x1]
        %vm494 = vcmask 261120
        %v495 = vsel %vm494, %v491, 0.0
        %496 = vadd.xlane.f32.xlu0 %v495
        %v497 = vpop.xlane.xlu0 %496
        %v498 = vrcp.pop 32.0
        %v499 = vmul.f32 %v497, %v498
        %v500 = vsub.f32 %v491, %v499
        %v501 = vmul.f32 %v500, %v500
        %v502 = vsel %vm494, %v501, 0.0
        %503 = vadd.xlane.f32.xlu0 %v502
        %v504 = vpop.xlane.xlu0 %503
        %v505 = vmul.f32 %v504, %v498
        %v506 = vadd.f32 %v505, 1e-05
        %v507 = vrsqrt.pop %v506
        %v508 = vmul.f32 %v500, %v507
        %v510 = vlaneseq
        %v511 = vshrl.u32 %v510, 7
        %v512 = vsub.s32 0, %v511
        %v513 = vrot.slane %v492, %v512
        %v515 = vmul.f32 %v508, %v513
        %v517 = vlaneseq
        %v518 = vshrl.u32 %v517, 7
        %v519 = vsub.s32 0, %v518
        %v520 = vrot.slane %v493, %v519
        %v522 = vadd.f32 %v515, %v520
        %v523 = vpack.c.bf16 %v522, %v522
        %v524 = vld [vmem:[%s3] sm:$0xf]
        %v525 = vld [vmem:[%s3 + $0x4] sm:$0xf]
        %v526 = vld [vmem:[%s3 + $0x8] sm:$0xf]
        %v527 = vld [vmem:[%s3 + $0xc] sm:$0xf]
        %v528 = vld [vmem:[%s4] sm:$0x1]
        %v530 = vlaneseq
        %v531 = vshrl.u32 %v530, 7
        %v532 = vsub.s32 0, %v531
        %v533 = vrot.slane %v528, %v532
        %v539 = vunpack.c.l.b16 %v524
        %v540 = vunpack.c.l.b16 %v525
        %v541 = vunpack.c.l.b16 %v526
        %v542 = vunpack.c.l.b16 %v527
        %v543 = vpack.c.b16 %v540, %v539
        %v544 = vpack.c.b16 %v542, %v541
        %v548 = vsel %vm494, %v523, 0
        %550 = vmatprep.subr.bf16.mxu0 0
        %551 = vmatpush1.bf16.msra.mxu0 %v543
        %552 = vmatprep.subr.bf16.mxu0 0
        %553 = vmatpush1.bf16.msra.mxu0 %v544
        %554 = vmatprep.subr.bf16.mxu0 0
        %555 = vmatpush1.bf16.msra.mxu0 0
        %556 = vmatprep.subr.bf16.mxu0 0
        %557 = vmatpush1.bf16.msra.mxu0 0
        %558 = vmatprep.subr.bf16.mxu0 0
        %559 = vmatpush1.bf16.msra.mxu0 0
        %560 = vmatprep.subr.bf16.mxu0 0
        %561 = vmatpush1.bf16.msra.mxu0 0
        %562 = vmatprep.subr.bf16.mxu0 0
        %563 = vmatpush1.bf16.msra.mxu0 0
        %564 = vmatprep.subr.bf16.mxu0 0
        %565 = vmatpush1.bf16.msra.mxu0 0
        %566 = vmatprep.subr.bf16.mxu0 0
        %567 = vmatpush1.bf16.msra.mxu0 0
        %568 = vmatprep.subr.bf16.mxu0 0
        %569 = vmatpush1.bf16.msra.mxu0 0
        %570 = vmatprep.subr.bf16.mxu0 0
        %571 = vmatpush1.bf16.msra.mxu0 0
        %572 = vmatprep.subr.bf16.mxu0 0
        %573 = vmatpush1.bf16.msra.mxu0 0
        %574 = vmatprep.subr.bf16.mxu0 0
        %575 = vmatpush1.bf16.msra.mxu0 0
        %576 = vmatprep.subr.bf16.mxu0 0
        %577 = vmatpush1.bf16.msra.mxu0 0
        %578 = vmatprep.subr.bf16.mxu0 0
        %579 = vmatpush1.bf16.msra.mxu0 0
        %580 = vmatprep.subr.bf16.mxu0 0
        %581 = vmatpush1.bf16.msra.mxu0 0
        %582 = vmatprep.mubr.bf16.mxu0 0
        %583 = vmatmul.mubr.bf16.gmra.mrb[0].mxu0 %v548
        %v584 = vpop.f32.mrb[0].mxu0
        %v585 = vadd.f32 %v533, %v584
        %v586 = vpop.f32.mrb[0].mxu0
        %v587 = vpop.f32.mrb[0].mxu0
        %v588 = vpop.f32.mrb[0].mxu0
        %589 = vdwg.mxu0
        %591 = vrot.lane.b32.xlu0 %v585, 120
        %v592 = vpop.permute.xlu0 %591
        %594 = vrot.lane.b32.xlu0 %v585, 112
        %v595 = vpop.permute.xlu0 %594
        %597 = vrot.lane.b32.xlu0 %v585, 104
        %v598 = vpop.permute.xlu0 %597
        %v600 = vld [vmem:[%s13] sm:$0xff]
        %v601 = vld [vmem:[%s14] sm:$0xff]
        %602 = vrot.lane.b32.xlu0 %v585, 124
        %v603 = vpop.permute.xlu0 %602
        %604 = vrot.lane.b32.xlu0 %v592, 124
        %v605 = vpop.permute.xlu0 %604
        %606 = vrot.lane.b32.xlu0 %v595, 124
        %v607 = vpop.permute.xlu0 %606
        %608 = vrot.lane.b32.xlu0 %v598, 124
        %v609 = vpop.permute.xlu0 %608
        %614 = vrot.lane.b32.xlu0 %v585, 4
        %v615 = vpop.permute.xlu0 %614
        %616 = vrot.lane.b32.xlu0 %v592, 4
        %v617 = vpop.permute.xlu0 %616
        %618 = vrot.lane.b32.xlu0 %v595, 4
        %v619 = vpop.permute.xlu0 %618
        %620 = vrot.lane.b32.xlu0 %v598, 4
        %v621 = vpop.permute.xlu0 %620
        %vm626 = vcmask 31744
        %v627 = vsel %vm626, %v603, %v615
        %v628 = vsel %vm626, %v605, %v617
        %v629 = vsel %vm626, %v607, %v619
        %v630 = vsel %vm626, %v609, %v621
        %v631 = vmul.f32 %v585, %v600
        %v632 = vmul.f32 %v592, %v600
        %v633 = vmul.f32 %v595, %v600
        %v634 = vmul.f32 %v598, %v600
        %v635 = vmul.f32 %v627, %v601
        %v636 = vmul.f32 %v628, %v601
        %v637 = vmul.f32 %v629, %v601
        %v638 = vmul.f32 %v630, %v601
        %v639 = vadd.f32 %v631, %v635
        %v640 = vadd.f32 %v632, %v636
        %v641 = vadd.f32 %v633, %v637
        %v642 = vadd.f32 %v634, %v638
        %v643 = vpack.c.bf16 %v639, %v639
        %v644 = vpack.c.bf16 %v640, %v640
        %v645 = vpack.c.bf16 %v641, %v641
        %v646 = vpack.c.bf16 %v642, %v642
        %647 = vrot.lane.b32.xlu0 %v585, 92
        %v648 = vpop.permute.xlu0 %647
        %649 = vrot.lane.b32.xlu0 %v592, 92
        %v650 = vpop.permute.xlu0 %649
        %651 = vrot.lane.b32.xlu0 %v595, 92
        %v652 = vpop.permute.xlu0 %651
        %653 = vrot.lane.b32.xlu0 %v598, 92
        %v654 = vpop.permute.xlu0 %653
        %659 = vrot.lane.b32.xlu0 %v585, 100
        %v660 = vpop.permute.xlu0 %659
        %661 = vrot.lane.b32.xlu0 %v592, 100
        %v662 = vpop.permute.xlu0 %661
        %663 = vrot.lane.b32.xlu0 %v595, 100
        %v664 = vpop.permute.xlu0 %663
        %665 = vrot.lane.b32.xlu0 %v598, 100
        %v666 = vpop.permute.xlu0 %665
        %v671 = vsel %vm626, %v648, %v660
        %v672 = vsel %vm626, %v650, %v662
        %v673 = vsel %vm626, %v652, %v664
        %v674 = vsel %vm626, %v654, %v666
        %676 = vrot.lane.b32.xlu0 %v600, 32
        %v677 = vpop.permute.xlu0 %676
        %v679 = vmul.f32 %v585, %v677
        %v680 = vmul.f32 %v592, %v677
        %v681 = vmul.f32 %v595, %v677
        %v682 = vmul.f32 %v598, %v677
        %v683 = vmul.f32 %v671, %v601
        %v684 = vmul.f32 %v672, %v601
        %v685 = vmul.f32 %v673, %v601
        %v686 = vmul.f32 %v674, %v601
        %691 = vrot.lane.b32.xlu0 %v683, 32
        %v692 = vpop.permute.xlu0 %691
        %693 = vrot.lane.b32.xlu0 %v684, 32
        %v694 = vpop.permute.xlu0 %693
        %695 = vrot.lane.b32.xlu0 %v685, 32
        %v696 = vpop.permute.xlu0 %695
        %697 = vrot.lane.b32.xlu0 %v686, 32
        %v698 = vpop.permute.xlu0 %697
        %v703 = vadd.f32 %v679, %v692
        %v704 = vadd.f32 %v680, %v694
        %v705 = vadd.f32 %v681, %v696
        %v706 = vadd.f32 %v682, %v698
        %v707 = vpack.c.bf16 %v703, %v703
        %v708 = vpack.c.bf16 %v704, %v704
        %v709 = vpack.c.bf16 %v705, %v705
        %v710 = vpack.c.bf16 %v706, %v706
        %712 = vrot.lane.b32.xlu0 %v707, 96
        %v713 = vpop.permute.xlu0 %712
        %vm714 = vcmask 64512
        %v716 = vsel %vm714, %v643, 0
        %v719 = vsel %vm714, %v713, 0
        %721 = vmatprep.subr.bf16.mxu0 0
        %722 = vmatpush1.bf16.xpose.msra.mxu0 %v719
        %723 = vmatprep.subr.bf16.mxu0 0
        %724 = vmatpush1.bf16.xpose.msra.mxu0 0
        %725 = vmatprep.subr.bf16.mxu0 0
        %726 = vmatpush1.bf16.xpose.msra.mxu0 0
        %727 = vmatprep.subr.bf16.mxu0 0
        %728 = vmatpush1.bf16.xpose.msra.mxu0 0
        %729 = vmatprep.subr.bf16.mxu0 0
        %730 = vmatpush1.bf16.xpose.msra.mxu0 0
        %731 = vmatprep.subr.bf16.mxu0 0
        %732 = vmatpush1.bf16.xpose.msra.mxu0 0
        %733 = vmatprep.subr.bf16.mxu0 0
        %734 = vmatpush1.bf16.xpose.msra.mxu0 0
        %735 = vmatprep.subr.bf16.mxu0 0
        %736 = vmatpush1.bf16.xpose.msra.mxu0 0
        %737 = vmatprep.subr.bf16.mxu0 0
        %738 = vmatpush1.bf16.xpose.msra.mxu0 0
        %739 = vmatprep.subr.bf16.mxu0 0
        %740 = vmatpush1.bf16.xpose.msra.mxu0 0
        %741 = vmatprep.subr.bf16.mxu0 0
        %742 = vmatpush1.bf16.xpose.msra.mxu0 0
        %743 = vmatprep.subr.bf16.mxu0 0
        %744 = vmatpush1.bf16.xpose.msra.mxu0 0
        %745 = vmatprep.subr.bf16.mxu0 0
        %746 = vmatpush1.bf16.xpose.msra.mxu0 0
        %747 = vmatprep.subr.bf16.mxu0 0
        %748 = vmatpush1.bf16.xpose.msra.mxu0 0
        %749 = vmatprep.subr.bf16.mxu0 0
        %750 = vmatpush1.bf16.xpose.msra.mxu0 0
        %751 = vmatprep.subr.bf16.mxu0 0
        %752 = vmatpush1.bf16.xpose.msra.mxu0 0
        %753 = vmatprep.mubr.bf16.mxu0 0
        %754 = vmatmul.mubr.bf16.gmra.mrb[0].mxu0 %v716
        %v755 = vpop.f32.mrb[0].mxu0
        %v756 = vadd.f32 0.0, %v755
        %v757 = vpop.f32.mrb[0].mxu0
        %v758 = vpop.f32.mrb[0].mxu0
        %v759 = vpop.f32.mrb[0].mxu0
        %760 = vdwg.mxu0
        %762 = vrot.lane.b32.xlu0 %v708, 96
        %v763 = vpop.permute.xlu0 %762
        %v765 = vsel %vm714, %v644, 0
        %v768 = vsel %vm714, %v763, 0
        %770 = vmatprep.subr.bf16.mxu0 0
        %771 = vmatpush1.bf16.xpose.msra.mxu0 %v768
        %772 = vmatprep.subr.bf16.mxu0 0
        %773 = vmatpush1.bf16.xpose.msra.mxu0 0
        %774 = vmatprep.subr.bf16.mxu0 0
        %775 = vmatpush1.bf16.xpose.msra.mxu0 0
        %776 = vmatprep.subr.bf16.mxu0 0
        %777 = vmatpush1.bf16.xpose.msra.mxu0 0
        %778 = vmatprep.subr.bf16.mxu0 0
        %779 = vmatpush1.bf16.xpose.msra.mxu0 0
        %780 = vmatprep.subr.bf16.mxu0 0
        %781 = vmatpush1.bf16.xpose.msra.mxu0 0
        %782 = vmatprep.subr.bf16.mxu0 0
        %783 = vmatpush1.bf16.xpose.msra.mxu0 0
        %784 = vmatprep.subr.bf16.mxu0 0
        %785 = vmatpush1.bf16.xpose.msra.mxu0 0
        %786 = vmatprep.subr.bf16.mxu0 0
        %787 = vmatpush1.bf16.xpose.msra.mxu0 0
        %788 = vmatprep.subr.bf16.mxu0 0
        %789 = vmatpush1.bf16.xpose.msra.mxu0 0
        %790 = vmatprep.subr.bf16.mxu0 0
        %791 = vmatpush1.bf16.xpose.msra.mxu0 0
        %792 = vmatprep.subr.bf16.mxu0 0
        %793 = vmatpush1.bf16.xpose.msra.mxu0 0
        %794 = vmatprep.subr.bf16.mxu0 0
        %795 = vmatpush1.bf16.xpose.msra.mxu0 0
        %796 = vmatprep.subr.bf16.mxu0 0
        %797 = vmatpush1.bf16.xpose.msra.mxu0 0
        %798 = vmatprep.subr.bf16.mxu0 0
        %799 = vmatpush1.bf16.xpose.msra.mxu0 0
        %800 = vmatprep.subr.bf16.mxu0 0
        %801 = vmatpush1.bf16.xpose.msra.mxu0 0
        %802 = vmatprep.mubr.bf16.mxu0 0
        %803 = vmatmul.mubr.bf16.gmra.mrb[0].mxu0 %v765
        %v804 = vpop.f32.mrb[0].mxu0
        %v805 = vadd.f32 0.0, %v804
        %v806 = vpop.f32.mrb[0].mxu0
        %v807 = vpop.f32.mrb[0].mxu0
        %v808 = vpop.f32.mrb[0].mxu0
        %809 = vdwg.mxu0
        %811 = vrot.lane.b32.xlu0 %v709, 96
        %v812 = vpop.permute.xlu0 %811
        %v814 = vsel %vm714, %v645, 0
        %v817 = vsel %vm714, %v812, 0
        %819 = vmatprep.subr.bf16.mxu0 0
        %820 = vmatpush1.bf16.xpose.msra.mxu0 %v817
        %821 = vmatprep.subr.bf16.mxu0 0
        %822 = vmatpush1.bf16.xpose.msra.mxu0 0
        %823 = vmatprep.subr.bf16.mxu0 0
        %824 = vmatpush1.bf16.xpose.msra.mxu0 0
        %825 = vmatprep.subr.bf16.mxu0 0
        %826 = vmatpush1.bf16.xpose.msra.mxu0 0
        %827 = vmatprep.subr.bf16.mxu0 0
        %828 = vmatpush1.bf16.xpose.msra.mxu0 0
        %829 = vmatprep.subr.bf16.mxu0 0
        %830 = vmatpush1.bf16.xpose.msra.mxu0 0
        %831 = vmatprep.subr.bf16.mxu0 0
        %832 = vmatpush1.bf16.xpose.msra.mxu0 0
        %833 = vmatprep.subr.bf16.mxu0 0
        %834 = vmatpush1.bf16.xpose.msra.mxu0 0
        %835 = vmatprep.subr.bf16.mxu0 0
        %836 = vmatpush1.bf16.xpose.msra.mxu0 0
        %837 = vmatprep.subr.bf16.mxu0 0
        %838 = vmatpush1.bf16.xpose.msra.mxu0 0
        %839 = vmatprep.subr.bf16.mxu0 0
        %840 = vmatpush1.bf16.xpose.msra.mxu0 0
        %841 = vmatprep.subr.bf16.mxu0 0
        %842 = vmatpush1.bf16.xpose.msra.mxu0 0
        %843 = vmatprep.subr.bf16.mxu0 0
        %844 = vmatpush1.bf16.xpose.msra.mxu0 0
        %845 = vmatprep.subr.bf16.mxu0 0
        %846 = vmatpush1.bf16.xpose.msra.mxu0 0
        %847 = vmatprep.subr.bf16.mxu0 0
        %848 = vmatpush1.bf16.xpose.msra.mxu0 0
        %849 = vmatprep.subr.bf16.mxu0 0
        %850 = vmatpush1.bf16.xpose.msra.mxu0 0
        %851 = vmatprep.mubr.bf16.mxu0 0
        %852 = vmatmul.mubr.bf16.gmra.mrb[0].mxu0 %v814
        %v853 = vpop.f32.mrb[0].mxu0
        %v854 = vadd.f32 0.0, %v853
        %v855 = vpop.f32.mrb[0].mxu0
        %v856 = vpop.f32.mrb[0].mxu0
        %v857 = vpop.f32.mrb[0].mxu0
        %858 = vdwg.mxu0
        %860 = vrot.lane.b32.xlu0 %v710, 96
        %v861 = vpop.permute.xlu0 %860
        %v863 = vsel %vm714, %v646, 0
        %v866 = vsel %vm714, %v861, 0
        %868 = vmatprep.subr.bf16.mxu0 0
        %869 = vmatpush1.bf16.xpose.msra.mxu0 %v866
        %870 = vmatprep.subr.bf16.mxu0 0
        %871 = vmatpush1.bf16.xpose.msra.mxu0 0
        %872 = vmatprep.subr.bf16.mxu0 0
        %873 = vmatpush1.bf16.xpose.msra.mxu0 0
        %874 = vmatprep.subr.bf16.mxu0 0
        %875 = vmatpush1.bf16.xpose.msra.mxu0 0
        %876 = vmatprep.subr.bf16.mxu0 0
        %877 = vmatpush1.bf16.xpose.msra.mxu0 0
        %878 = vmatprep.subr.bf16.mxu0 0
        %879 = vmatpush1.bf16.xpose.msra.mxu0 0
        %880 = vmatprep.subr.bf16.mxu0 0
        %881 = vmatpush1.bf16.xpose.msra.mxu0 0
        %882 = vmatprep.subr.bf16.mxu0 0
        %883 = vmatpush1.bf16.xpose.msra.mxu0 0
        %884 = vmatprep.subr.bf16.mxu0 0
        %885 = vmatpush1.bf16.xpose.msra.mxu0 0
        %886 = vmatprep.subr.bf16.mxu0 0
        %887 = vmatpush1.bf16.xpose.msra.mxu0 0
        %888 = vmatprep.subr.bf16.mxu0 0
        %889 = vmatpush1.bf16.xpose.msra.mxu0 0
        %890 = vmatprep.subr.bf16.mxu0 0
        %891 = vmatpush1.bf16.xpose.msra.mxu0 0
        %892 = vmatprep.subr.bf16.mxu0 0
        %893 = vmatpush1.bf16.xpose.msra.mxu0 0
        %894 = vmatprep.subr.bf16.mxu0 0
        %895 = vmatpush1.bf16.xpose.msra.mxu0 0
        %896 = vmatprep.subr.bf16.mxu0 0
        %897 = vmatpush1.bf16.xpose.msra.mxu0 0
        %898 = vmatprep.subr.bf16.mxu0 0
        %899 = vmatpush1.bf16.xpose.msra.mxu0 0
        %900 = vmatprep.mubr.bf16.mxu0 0
        %901 = vmatmul.mubr.bf16.gmra.mrb[0].mxu0 %v863
        %v902 = vpop.f32.mrb[0].mxu0
        %v903 = vadd.f32 0.0, %v902
        %v904 = vpop.f32.mrb[0].mxu0
        %v905 = vpop.f32.mrb[0].mxu0
        %v906 = vpop.f32.mrb[0].mxu0
        %907 = vdwg.mxu0
        %v908 = vlaneseq
        %v909 = vshrl.u32 %v908, 7
        %v910 = vlaneseq
        %v911 = vand.u32 %v910, 127
        %vm912 = vcmp.le.s32.totalorder %v911, %v909
        %v913 = vsel %vm912, 1, 0
        %vm914 = vcmp.eq.s32.totalorder %v913, 1
        %v915 = vsel %vm914, %v756, -1e+30
        %v916 = vsel %vm914, %v805, -1e+30
        %v917 = vsel %vm914, %v854, -1e+30
        %v918 = vsel %vm914, %v903, -1e+30
        %v919 = vsel %vm714, %v915, -inf
        %920 = vmax.xlane.f32.xlu0 %v919
        %v921 = vpop.xlane.xlu0 %920
        %v922 = vsel %vm714, %v916, -inf
        %923 = vmax.xlane.f32.xlu0 %v922
        %v924 = vpop.xlane.xlu0 %923
        %v925 = vsel %vm714, %v917, -inf
        %926 = vmax.xlane.f32.xlu0 %v925
        %v927 = vpop.xlane.xlu0 %926
        %v928 = vsel %vm714, %v918, -inf
        %929 = vmax.xlane.f32.xlu0 %v928
        %v930 = vpop.xlane.xlu0 %929
        %v931 = vsub.f32 %v915, %v921
        %v932 = vsub.f32 %v916, %v924
        %v933 = vsub.f32 %v917, %v927
        %v934 = vsub.f32 %v918, %v930
        %v935 = vmul.f32 %v931, 1.442695
        %v936 = vpow.pop %v935
        %v937 = vmul.f32 %v932, 1.442695
        %v938 = vpow.pop %v937
        %v939 = vmul.f32 %v933, 1.442695
        %v940 = vpow.pop %v939
        %v941 = vmul.f32 %v934, 1.442695
        %v942 = vpow.pop %v941
        %v943 = vsel %vm714, %v936, 0.0
        %944 = vadd.xlane.f32.xlu0 %v943
        %v945 = vpop.xlane.xlu0 %944
        %v946 = vsel %vm714, %v938, 0.0
        %947 = vadd.xlane.f32.xlu0 %v946
        %v948 = vpop.xlane.xlu0 %947
        %v949 = vsel %vm714, %v940, 0.0
        %950 = vadd.xlane.f32.xlu0 %v949
        %v951 = vpop.xlane.xlu0 %950
        %v952 = vsel %vm714, %v942, 0.0
        %953 = vadd.xlane.f32.xlu0 %v952
        %v954 = vpop.xlane.xlu0 %953
        %v955 = vrcp.pop %v945
        %v956 = vrcp.pop %v948
        %v957 = vrcp.pop %v951
        %v958 = vrcp.pop %v954
        %v959 = vmul.f32 %v936, %v955
        %v960 = vmul.f32 %v938, %v956
        %v961 = vmul.f32 %v940, %v957
        %v962 = vmul.f32 %v942, %v958
        %v963 = vpack.c.bf16 %v959, %v959
        %v964 = vpack.c.bf16 %v960, %v960
        %v965 = vpack.c.bf16 %v961, %v961
        %v966 = vpack.c.bf16 %v962, %v962
        %v967 = vpack.c.bf16 %v585, %v585
        %v968 = vpack.c.bf16 %v592, %v592
        %v969 = vpack.c.bf16 %v595, %v595
        %v970 = vpack.c.bf16 %v598, %v598
        %972 = vrot.lane.b32.xlu0 %v967, 64
        %v973 = vpop.permute.xlu0 %972
        %v975 = vsel %vm714, %v963, 0
        %vm977 = vcmask 1043456
        %v979 = vsel %vm977, %v973, 0
        %981 = vmatprep.subr.bf16.mxu0 0
        %982 = vmatpush1.bf16.msra.mxu0 %v979
        %983 = vmatprep.subr.bf16.mxu0 0
        %984 = vmatpush1.bf16.msra.mxu0 0
        %985 = vmatprep.subr.bf16.mxu0 0
        %986 = vmatpush1.bf16.msra.mxu0 0
        %987 = vmatprep.subr.bf16.mxu0 0
        %988 = vmatpush1.bf16.msra.mxu0 0
        %989 = vmatprep.subr.bf16.mxu0 0
        %990 = vmatpush1.bf16.msra.mxu0 0
        %991 = vmatprep.subr.bf16.mxu0 0
        %992 = vmatpush1.bf16.msra.mxu0 0
        %993 = vmatprep.subr.bf16.mxu0 0
        %994 = vmatpush1.bf16.msra.mxu0 0
        %995 = vmatprep.subr.bf16.mxu0 0
        %996 = vmatpush1.bf16.msra.mxu0 0
        %997 = vmatprep.subr.bf16.mxu0 0
        %998 = vmatpush1.bf16.msra.mxu0 0
        %999 = vmatprep.subr.bf16.mxu0 0
        %1000 = vmatpush1.bf16.msra.mxu0 0
        %1001 = vmatprep.subr.bf16.mxu0 0
        %1002 = vmatpush1.bf16.msra.mxu0 0
        %1003 = vmatprep.subr.bf16.mxu0 0
        %1004 = vmatpush1.bf16.msra.mxu0 0
        %1005 = vmatprep.subr.bf16.mxu0 0
        %1006 = vmatpush1.bf16.msra.mxu0 0
        %1007 = vmatprep.subr.bf16.mxu0 0
        %1008 = vmatpush1.bf16.msra.mxu0 0
        %1009 = vmatprep.subr.bf16.mxu0 0
        %1010 = vmatpush1.bf16.msra.mxu0 0
        %1011 = vmatprep.subr.bf16.mxu0 0
        %1012 = vmatpush1.bf16.msra.mxu0 0
        %1013 = vmatprep.mubr.bf16.mxu0 0
        %1014 = vmatmul.mubr.bf16.gmra.mrb[0].mxu0 %v975
        %v1015 = vpop.f32.mrb[0].mxu0
        %v1016 = vadd.f32 0.0, %v1015
        %v1017 = vpop.f32.mrb[0].mxu0
        %v1018 = vpop.f32.mrb[0].mxu0
        %v1019 = vpop.f32.mrb[0].mxu0
        %1020 = vdwg.mxu0
        %1022 = vrot.lane.b32.xlu0 %v968, 64
        %v1023 = vpop.permute.xlu0 %1022
        %v1025 = vsel %vm714, %v964, 0
        %v1028 = vsel %vm977, %v1023, 0
        %1030 = vmatprep.subr.bf16.mxu0 0
        %1031 = vmatpush1.bf16.msra.mxu0 %v1028
        %1032 = vmatprep.subr.bf16.mxu0 0
        %1033 = vmatpush1.bf16.msra.mxu0 0
        %1034 = vmatprep.subr.bf16.mxu0 0
        %1035 = vmatpush1.bf16.msra.mxu0 0
        %1036 = vmatprep.subr.bf16.mxu0 0
        %1037 = vmatpush1.bf16.msra.mxu0 0
        %1038 = vmatprep.subr.bf16.mxu0 0
        %1039 = vmatpush1.bf16.msra.mxu0 0
        %1040 = vmatprep.subr.bf16.mxu0 0
        %1041 = vmatpush1.bf16.msra.mxu0 0
        %1042 = vmatprep.subr.bf16.mxu0 0
        %1043 = vmatpush1.bf16.msra.mxu0 0
        %1044 = vmatprep.subr.bf16.mxu0 0
        %1045 = vmatpush1.bf16.msra.mxu0 0
        %1046 = vmatprep.subr.bf16.mxu0 0
        %1047 = vmatpush1.bf16.msra.mxu0 0
        %1048 = vmatprep.subr.bf16.mxu0 0
        %1049 = vmatpush1.bf16.msra.mxu0 0
        %1050 = vmatprep.subr.bf16.mxu0 0
        %1051 = vmatpush1.bf16.msra.mxu0 0
        %1052 = vmatprep.subr.bf16.mxu0 0
        %1053 = vmatpush1.bf16.msra.mxu0 0
        %1054 = vmatprep.subr.bf16.mxu0 0
        %1055 = vmatpush1.bf16.msra.mxu0 0
        %1056 = vmatprep.subr.bf16.mxu0 0
        %1057 = vmatpush1.bf16.msra.mxu0 0
        %1058 = vmatprep.subr.bf16.mxu0 0
        %1059 = vmatpush1.bf16.msra.mxu0 0
        %1060 = vmatprep.subr.bf16.mxu0 0
        %1061 = vmatpush1.bf16.msra.mxu0 0
        %1062 = vmatprep.mubr.bf16.mxu0 0
        %1063 = vmatmul.mubr.bf16.gmra.mrb[0].mxu0 %v1025
        %v1064 = vpop.f32.mrb[0].mxu0
        %v1065 = vadd.f32 0.0, %v1064
        %v1066 = vpop.f32.mrb[0].mxu0
        %v1067 = vpop.f32.mrb[0].mxu0
        %v1068 = vpop.f32.mrb[0].mxu0
        %1069 = vdwg.mxu0
        %1071 = vrot.lane.b32.xlu0 %v969, 64
        %v1072 = vpop.permute.xlu0 %1071
        %v1074 = vsel %vm714, %v965, 0
        %v1077 = vsel %vm977, %v1072, 0
        %1079 = vmatprep.subr.bf16.mxu0 0
        %1080 = vmatpush1.bf16.msra.mxu0 %v1077
        %1081 = vmatprep.subr.bf16.mxu0 0
        %1082 = vmatpush1.bf16.msra.mxu0 0
        %1083 = vmatprep.subr.bf16.mxu0 0
        %1084 = vmatpush1.bf16.msra.mxu0 0
        %1085 = vmatprep.subr.bf16.mxu0 0
        %1086 = vmatpush1.bf16.msra.mxu0 0
        %1087 = vmatprep.subr.bf16.mxu0 0
        %1088 = vmatpush1.bf16.msra.mxu0 0
        %1089 = vmatprep.subr.bf16.mxu0 0
        %1090 = vmatpush1.bf16.msra.mxu0 0
        %1091 = vmatprep.subr.bf16.mxu0 0
        %1092 = vmatpush1.bf16.msra.mxu0 0
        %1093 = vmatprep.subr.bf16.mxu0 0
        %1094 = vmatpush1.bf16.msra.mxu0 0
        %1095 = vmatprep.subr.bf16.mxu0 0
        %1096 = vmatpush1.bf16.msra.mxu0 0
        %1097 = vmatprep.subr.bf16.mxu0 0
        %1098 = vmatpush1.bf16.msra.mxu0 0
        %1099 = vmatprep.subr.bf16.mxu0 0
        %1100 = vmatpush1.bf16.msra.mxu0 0
        %1101 = vmatprep.subr.bf16.mxu0 0
        %1102 = vmatpush1.bf16.msra.mxu0 0
        %1103 = vmatprep.subr.bf16.mxu0 0
        %1104 = vmatpush1.bf16.msra.mxu0 0
        %1105 = vmatprep.subr.bf16.mxu0 0
        %1106 = vmatpush1.bf16.msra.mxu0 0
        %1107 = vmatprep.subr.bf16.mxu0 0
        %1108 = vmatpush1.bf16.msra.mxu0 0
        %1109 = vmatprep.subr.bf16.mxu0 0
        %1110 = vmatpush1.bf16.msra.mxu0 0
        %1111 = vmatprep.mubr.bf16.mxu0 0
        %1112 = vmatmul.mubr.bf16.gmra.mrb[0].mxu0 %v1074
        %v1113 = vpop.f32.mrb[0].mxu0
        %v1114 = vadd.f32 0.0, %v1113
        %v1115 = vpop.f32.mrb[0].mxu0
        %v1116 = vpop.f32.mrb[0].mxu0
        %v1117 = vpop.f32.mrb[0].mxu0
        %1118 = vdwg.mxu0
        %1120 = vrot.lane.b32.xlu0 %v970, 64
        %v1121 = vpop.permute.xlu0 %1120
        %v1123 = vsel %vm714, %v966, 0
        %v1126 = vsel %vm977, %v1121, 0
        %1128 = vmatprep.subr.bf16.mxu0 0
        %1129 = vmatpush1.bf16.msra.mxu0 %v1126
        %1130 = vmatprep.subr.bf16.mxu0 0
        %1131 = vmatpush1.bf16.msra.mxu0 0
        %1132 = vmatprep.subr.bf16.mxu0 0
        %1133 = vmatpush1.bf16.msra.mxu0 0
        %1134 = vmatprep.subr.bf16.mxu0 0
        %1135 = vmatpush1.bf16.msra.mxu0 0
        %1136 = vmatprep.subr.bf16.mxu0 0
        %1137 = vmatpush1.bf16.msra.mxu0 0
        %1138 = vmatprep.subr.bf16.mxu0 0
        %1139 = vmatpush1.bf16.msra.mxu0 0
        %1140 = vmatprep.subr.bf16.mxu0 0
        %1141 = vmatpush1.bf16.msra.mxu0 0
        %1142 = vmatprep.subr.bf16.mxu0 0
        %1143 = vmatpush1.bf16.msra.mxu0 0
        %1144 = vmatprep.subr.bf16.mxu0 0
        %1145 = vmatpush1.bf16.msra.mxu0 0
        %1146 = vmatprep.subr.bf16.mxu0 0
        %1147 = vmatpush1.bf16.msra.mxu0 0
        %1148 = vmatprep.subr.bf16.mxu0 0
        %1149 = vmatpush1.bf16.msra.mxu0 0
        %1150 = vmatprep.subr.bf16.mxu0 0
        %1151 = vmatpush1.bf16.msra.mxu0 0
        %1152 = vmatprep.subr.bf16.mxu0 0
        %1153 = vmatpush1.bf16.msra.mxu0 0
        %1154 = vmatprep.subr.bf16.mxu0 0
        %1155 = vmatpush1.bf16.msra.mxu0 0
        %1156 = vmatprep.subr.bf16.mxu0 0
        %1157 = vmatpush1.bf16.msra.mxu0 0
        %1158 = vmatprep.subr.bf16.mxu0 0
        %1159 = vmatpush1.bf16.msra.mxu0 0
        %1160 = vmatprep.mubr.bf16.mxu0 0
        %1161 = vmatmul.mubr.bf16.gmra.mrb[0].mxu0 %v1123
        %v1162 = vpop.f32.mrb[0].mxu0
        %v1163 = vadd.f32 0.0, %v1162
        %v1164 = vpop.f32.mrb[0].mxu0
        %v1165 = vpop.f32.mrb[0].mxu0
        %v1166 = vpop.f32.mrb[0].mxu0
        %1167 = vdwg.mxu0
        %1169 = vrot.lane.b32.xlu0 %v1065, 8
        %v1170 = vpop.permute.xlu0 %1169
        %1173 = vrot.lane.b32.xlu0 %v1114, 16
        %v1174 = vpop.permute.xlu0 %1173
        %1177 = vrot.lane.b32.xlu0 %v1163, 24
        %v1178 = vpop.permute.xlu0 %1177
        %v1180 = vsel %vm714, %v1016, %v1170
        %vm1181 = vcmask 130048
        %v1182 = vsel %vm1181, %v1180, %v1174
        %vm1183 = vcmask 195584
        %v1184 = vsel %vm1183, %v1182, %v1178
        %v1185 = vpack.c.bf16 %v1184, %v1184
        %v1186 = vld [vmem:[%s5] sm:$0xf]
        %v1187 = vld [vmem:[%s5 + $0x4] sm:$0xf]
        %v1188 = vld [vmem:[%s5 + $0x8] sm:$0xf]
        %v1189 = vld [vmem:[%s5 + $0xc] sm:$0xf]
        %v1190 = vld [vmem:[%s6] sm:$0x1]
        %v1192 = vlaneseq
        %v1193 = vshrl.u32 %v1192, 7
        %v1194 = vsub.s32 0, %v1193
        %v1195 = vrot.slane %v1190, %v1194
        %v1201 = vunpack.c.l.b16 %v1186
        %v1202 = vunpack.c.l.b16 %v1187
        %v1203 = vunpack.c.l.b16 %v1188
        %v1204 = vunpack.c.l.b16 %v1189
        %v1205 = vpack.c.b16 %v1202, %v1201
        %v1206 = vpack.c.b16 %v1204, %v1203
        %v1210 = vsel %vm494, %v1185, 0
        %1212 = vmatprep.subr.bf16.mxu0 0
        %1213 = vmatpush1.bf16.msra.mxu0 %v1205
        %1214 = vmatprep.subr.bf16.mxu0 0
        %1215 = vmatpush1.bf16.msra.mxu0 %v1206
        %1216 = vmatprep.subr.bf16.mxu0 0
        %1217 = vmatpush1.bf16.msra.mxu0 0
        %1218 = vmatprep.subr.bf16.mxu0 0
        %1219 = vmatpush1.bf16.msra.mxu0 0
        %1220 = vmatprep.subr.bf16.mxu0 0
        %1221 = vmatpush1.bf16.msra.mxu0 0
        %1222 = vmatprep.subr.bf16.mxu0 0
        %1223 = vmatpush1.bf16.msra.mxu0 0
        %1224 = vmatprep.subr.bf16.mxu0 0
        %1225 = vmatpush1.bf16.msra.mxu0 0
        %1226 = vmatprep.subr.bf16.mxu0 0
        %1227 = vmatpush1.bf16.msra.mxu0 0
        %1228 = vmatprep.subr.bf16.mxu0 0
        %1229 = vmatpush1.bf16.msra.mxu0 0
        %1230 = vmatprep.subr.bf16.mxu0 0
        %1231 = vmatpush1.bf16.msra.mxu0 0
        %1232 = vmatprep.subr.bf16.mxu0 0
        %1233 = vmatpush1.bf16.msra.mxu0 0
        %1234 = vmatprep.subr.bf16.mxu0 0
        %1235 = vmatpush1.bf16.msra.mxu0 0
        %1236 = vmatprep.subr.bf16.mxu0 0
        %1237 = vmatpush1.bf16.msra.mxu0 0
        %1238 = vmatprep.subr.bf16.mxu0 0
        %1239 = vmatpush1.bf16.msra.mxu0 0
        %1240 = vmatprep.subr.bf16.mxu0 0
        %1241 = vmatpush1.bf16.msra.mxu0 0
        %1242 = vmatprep.subr.bf16.mxu0 0
        %1243 = vmatpush1.bf16.msra.mxu0 0
        %1244 = vmatprep.mubr.bf16.mxu0 0
        %1245 = vmatmul.mubr.bf16.gmra.mrb[0].mxu0 %v1210
        %v1246 = vpop.f32.mrb[0].mxu0
        %v1247 = vadd.f32 %v1195, %v1246
        %v1248 = vpop.f32.mrb[0].mxu0
        %v1249 = vpop.f32.mrb[0].mxu0
        %v1250 = vpop.f32.mrb[0].mxu0
        %1251 = vdwg.mxu0
        %v1252 = vadd.f32 %v491, %v1247
        %v1253 = vld [vmem:[%s7] sm:$0x1]
        %v1254 = vld [vmem:[%s8] sm:$0x1]
        %v1255 = vsel %vm494, %v1252, 0.0
        %1256 = vadd.xlane.f32.xlu0 %v1255
        %v1257 = vpop.xlane.xlu0 %1256
        %v1258 = vmul.f32 %v1257, %v498
        %v1259 = vsub.f32 %v1252, %v1258
        %v1260 = vmul.f32 %v1259, %v1259
        %v1261 = vsel %vm494, %v1260, 0.0
        %1262 = vadd.xlane.f32.xlu0 %v1261
        %v1263 = vpop.xlane.xlu0 %1262
        %v1264 = vmul.f32 %v1263, %v498
        %v1265 = vadd.f32 %v1264, 1e-05
        %v1266 = vrsqrt.pop %v1265
        %v1267 = vmul.f32 %v1259, %v1266
        %v1269 = vlaneseq
        %v1270 = vshrl.u32 %v1269, 7
        %v1271 = vsub.s32 0, %v1270
        %v1272 = vrot.slane %v1253, %v1271
        %v1274 = vmul.f32 %v1267, %v1272
        %v1276 = vlaneseq
        %v1277 = vshrl.u32 %v1276, 7
        %v1278 = vsub.s32 0, %v1277
        %v1279 = vrot.slane %v1254, %v1278
        %v1281 = vadd.f32 %v1274, %v1279
        %v1282 = vpack.c.bf16 %v1281, %v1281
        %v1283 = vld [vmem:[%s9] sm:$0xf]
        %v1284 = vld [vmem:[%s9 + $0x4] sm:$0xf]
        %v1285 = vld [vmem:[%s9 + $0x8] sm:$0xf]
        %v1286 = vld [vmem:[%s9 + $0xc] sm:$0xf]
        %v1287 = vld [vmem:[%s10] sm:$0x1]
        %v1289 = vlaneseq
        %v1290 = vshrl.u32 %v1289, 7
        %v1291 = vsub.s32 0, %v1290
        %v1292 = vrot.slane %v1287, %v1291
        %v1298 = vunpack.c.l.b16 %v1283
        %v1299 = vunpack.c.l.b16 %v1284
        %v1300 = vunpack.c.l.b16 %v1285
        %v1301 = vunpack.c.l.b16 %v1286
        %v1302 = vpack.c.b16 %v1299, %v1298
        %v1303 = vpack.c.b16 %v1301, %v1300
        %v1307 = vsel %vm494, %v1282, 0
        %1309 = vmatprep.subr.bf16.mxu0 0
        %1310 = vmatpush1.bf16.msra.mxu0 %v1302
        %1311 = vmatprep.subr.bf16.mxu0 0
        %1312 = vmatpush1.bf16.msra.mxu0 %v1303
        %1313 = vmatprep.subr.bf16.mxu0 0
        %1314 = vmatpush1.bf16.msra.mxu0 0
        %1315 = vmatprep.subr.bf16.mxu0 0
        %1316 = vmatpush1.bf16.msra.mxu0 0
        %1317 = vmatprep.subr.bf16.mxu0 0
        %1318 = vmatpush1.bf16.msra.mxu0 0
        %1319 = vmatprep.subr.bf16.mxu0 0
        %1320 = vmatpush1.bf16.msra.mxu0 0
        %1321 = vmatprep.subr.bf16.mxu0 0
        %1322 = vmatpush1.bf16.msra.mxu0 0
        %1323 = vmatprep.subr.bf16.mxu0 0
        %1324 = vmatpush1.bf16.msra.mxu0 0
        %1325 = vmatprep.subr.bf16.mxu0 0
        %1326 = vmatpush1.bf16.msra.mxu0 0
        %1327 = vmatprep.subr.bf16.mxu0 0
        %1328 = vmatpush1.bf16.msra.mxu0 0
        %1329 = vmatprep.subr.bf16.mxu0 0
        %1330 = vmatpush1.bf16.msra.mxu0 0
        %1331 = vmatprep.subr.bf16.mxu0 0
        %1332 = vmatpush1.bf16.msra.mxu0 0
        %1333 = vmatprep.subr.bf16.mxu0 0
        %1334 = vmatpush1.bf16.msra.mxu0 0
        %1335 = vmatprep.subr.bf16.mxu0 0
        %1336 = vmatpush1.bf16.msra.mxu0 0
        %1337 = vmatprep.subr.bf16.mxu0 0
        %1338 = vmatpush1.bf16.msra.mxu0 0
        %1339 = vmatprep.subr.bf16.mxu0 0
        %1340 = vmatpush1.bf16.msra.mxu0 0
        %1341 = vmatprep.mubr.bf16.mxu0 0
        %1342 = vmatmul.mubr.bf16.gmra.mrb[0].mxu0 %v1307
        %v1343 = vpop.f32.mrb[0].mxu0
        %v1344 = vadd.f32 %v1292, %v1343
        %v1345 = vpop.f32.mrb[0].mxu0
        %v1346 = vpop.f32.mrb[0].mxu0
        %v1347 = vpop.f32.mrb[0].mxu0
        %1348 = vdwg.mxu0
        %v1349 = vmul.f32 %v1344, %v1344
        %v1350 = vmul.f32 %v1344, %v1349
        %v1351 = vmul.f32 %v1350, 0.044715
        %v1352 = vadd.f32 %v1344, %v1351
        %v1353 = vmul.f32 %v1352, 0.7978846
        %v1354 = vtanh.pop %v1353
        %v1355 = vadd.f32 %v1354, 1.0
        %v1356 = vmul.f32 %v1355, 0.5
        %v1357 = vmul.f32 %v1344, %v1356
        %v1358 = vpack.c.bf16 %v1357, %v1357
        %v1359 = vld [vmem:[%s11] sm:$0xf]
        %v1360 = vld [vmem:[%s11 + $0x4] sm:$0xf]
        %v1361 = vld [vmem:[%s11 + $0x8] sm:$0xf]
        %v1362 = vld [vmem:[%s11 + $0xc] sm:$0xf]
        %v1363 = vld [vmem:[%s11 + $0x10] sm:$0xf]
        %v1364 = vld [vmem:[%s11 + $0x14] sm:$0xf]
        %v1365 = vld [vmem:[%s11 + $0x18] sm:$0xf]
        %v1366 = vld [vmem:[%s11 + $0x1c] sm:$0xf]
        %v1367 = vld [vmem:[%s11 + $0x20] sm:$0xf]
        %v1368 = vld [vmem:[%s11 + $0x24] sm:$0xf]
        %v1369 = vld [vmem:[%s11 + $0x28] sm:$0xf]
        %v1370 = vld [vmem:[%s11 + $0x2c] sm:$0xf]
        %v1371 = vld [vmem:[%s11 + $0x30] sm:$0xf]
        %v1372 = vld [vmem:[%s11 + $0x34] sm:$0xf]
        %v1373 = vld [vmem:[%s11 + $0x38] sm:$0xf]
        %v1374 = vld [vmem:[%s11 + $0x3c] sm:$0xf]
        %v1375 = vld [vmem:[%s12] sm:$0x1]
        %v1377 = vlaneseq
        %v1378 = vshrl.u32 %v1377, 7
        %v1379 = vsub.s32 0, %v1378
        %v1380 = vrot.slane %v1375, %v1379
        %v1398 = vunpack.c.l.b16 %v1359
        %v1399 = vunpack.c.l.b16 %v1360
        %v1400 = vunpack.c.l.b16 %v1361
        %v1401 = vunpack.c.l.b16 %v1362
        %v1402 = vunpack.c.l.b16 %v1363
        %v1403 = vunpack.c.l.b16 %v1364
        %v1404 = vunpack.c.l.b16 %v1365
        %v1405 = vunpack.c.l.b16 %v1366
        %v1406 = vunpack.c.l.b16 %v1367
        %v1407 = vunpack.c.l.b16 %v1368
        %v1408 = vunpack.c.l.b16 %v1369
        %v1409 = vunpack.c.l.b16 %v1370
        %v1410 = vunpack.c.l.b16 %v1371
        %v1411 = vunpack.c.l.b16 %v1372
        %v1412 = vunpack.c.l.b16 %v1373
        %v1413 = vunpack.c.l.b16 %v1374
        %v1414 = vpack.c.b16 %v1399, %v1398
        %v1415 = vpack.c.b16 %v1401, %v1400
        %v1416 = vpack.c.b16 %v1403, %v1402
        %v1417 = vpack.c.b16 %v1405, %v1404
        %v1418 = vpack.c.b16 %v1407, %v1406
        %v1419 = vpack.c.b16 %v1409, %v1408
        %v1420 = vpack.c.b16 %v1411, %v1410
        %v1421 = vpack.c.b16 %v1413, %v1412
        %1430 = vmatprep.subr.bf16.mxu0 0
        %1431 = vmatpush1.bf16.msra.mxu0 %v1414
        %1432 = vmatprep.subr.bf16.mxu0 0
        %1433 = vmatpush1.bf16.msra.mxu0 %v1415
        %1434 = vmatprep.subr.bf16.mxu0 0
        %1435 = vmatpush1.bf16.msra.mxu0 %v1416
        %1436 = vmatprep.subr.bf16.mxu0 0
        %1437 = vmatpush1.bf16.msra.mxu0 %v1417
        %1438 = vmatprep.subr.bf16.mxu0 0
        %1439 = vmatpush1.bf16.msra.mxu0 %v1418
        %1440 = vmatprep.subr.bf16.mxu0 0
        %1441 = vmatpush1.bf16.msra.mxu0 %v1419
        %1442 = vmatprep.subr.bf16.mxu0 0
        %1443 = vmatpush1.bf16.msra.mxu0 %v1420
        %1444 = vmatprep.subr.bf16.mxu0 0
        %1445 = vmatpush1.bf16.msra.mxu0 %v1421
        %1446 = vmatprep.subr.bf16.mxu0 0
        %1447 = vmatpush1.bf16.msra.mxu0 0
        %1448 = vmatprep.subr.bf16.mxu0 0
        %1449 = vmatpush1.bf16.msra.mxu0 0
        %1450 = vmatprep.subr.bf16.mxu0 0
        %1451 = vmatpush1.bf16.msra.mxu0 0
        %1452 = vmatprep.subr.bf16.mxu0 0
        %1453 = vmatpush1.bf16.msra.mxu0 0
        %1454 = vmatprep.subr.bf16.mxu0 0
        %1455 = vmatpush1.bf16.msra.mxu0 0
        %1456 = vmatprep.subr.bf16.mxu0 0
        %1457 = vmatpush1.bf16.msra.mxu0 0
        %1458 = vmatprep.subr.bf16.mxu0 0
        %1459 = vmatpush1.bf16.msra.mxu0 0
        %1460 = vmatprep.subr.bf16.mxu0 0
        %1461 = vmatpush1.bf16.msra.mxu0 0
        %1462 = vmatprep.mubr.bf16.mxu0 0
        %1463 = vmatmul.mubr.bf16.gmra.mrb[0].mxu0 %v1358
        %v1464 = vpop.f32.mrb[0].mxu0
        %v1465 = vadd.f32 %v1380, %v1464
        %v1466 = vpop.f32.mrb[0].mxu0
        %v1467 = vpop.f32.mrb[0].mxu0
        %v1468 = vpop.f32.mrb[0].mxu0
        %1469 = vdwg.mxu0
        %v1470 = vadd.f32 %v1252, %v1465
        %1471 = vst.msk [vmem:[%s485] sm:$0xff] %vm494, %v1470
        %s1472 = sand.u32 %s357, 1
        %s1473 = scalar_lea.sflag [#allocation3], %s1472
        %s1474 = sand.u32 %s357, 1
        %s1475 = smul.addr %s1474, 8
        %s1476 = scalar_lea.vmem [#allocation2], %s1475
        // Predicated region
        $region81: #{tpu_custom_call.1} parent=79 // pred_check
          %p1477 = pneg %p367
        $region82: #{tpu_custom_call.1} parent=79 // pred_check_branch
          %1479 = sbr.rel (%p1477) target = $region84
        $region83: #{tpu_custom_call.1} parent=79 // pred_region
          %s1481 = ssub.s32 128, 128
          %1482 = vsyncadd %s1473, %s1481
          %s1483 = smul.addr %s29, 128
          %s1484 = scalar_lea.hbm %s15, %s1483
          %s1486 = sshll.u32 %s1476, 4
          %s1487 = int_to_ptr.vmem [resolvable:$true] %s1486
          %1489 = dma.vmem_to_hbm [thread:$0]  %s1487, 128, %s1484, %s1473
        $region84: #{tpu_custom_call.1} parent=79 // pred_fallthru
          _
      $region80: #{tpu_custom_call.1} parent=5 // pred_fallthru
        _
      %p1490 = scmp.le.s32.totalorder 2, %s24
      // Predicated region
      $region85: #{tpu_custom_call.1} parent=5 // pred_check
        %p1491 = pneg %p1490
      $region86: #{tpu_custom_call.1} parent=5 // pred_check_branch
        %1493 = sbr.rel (%p1491) target = $region88
      $region87: #{tpu_custom_call.1} parent=5 // pred_region
        %s1494 = ssub.s32 %s24, 2
        // Predicated region
        $region89: #{tpu_custom_call.1} parent=87 // pred_check
          %p1495 = pneg %p373
        $region90: #{tpu_custom_call.1} parent=87 // pred_check_branch
          %1497 = sbr.rel (%p1495) target = $region92
        $region91: #{tpu_custom_call.1} parent=87 // pred_region
          %s1498 = sand.u32 %s358, 1
          %s1499 = scalar_lea.sflag [#allocation3], %s1498
          %s1500 = sand.u32 %s358, 1
          %s1501 = smul.addr %s1500, 8
          %s1502 = scalar_lea.vmem [#allocation2], %s1501
          %1503 = dma.done %s1499, 128
        $region92: #{tpu_custom_call.1} parent=87 // pred_fallthru
          _
      $region88: #{tpu_custom_call.1} parent=5 // pred_fallthru
        _
    $region6: #{tpu_custom_call.1} parent=1 // loop_footer
      %s28 = sadd.s32 1, %s24
    $region7: #{tpu_custom_call.1} parent=1 // loop_footer_branch
      %23 = sbr.rel target = $region3
    $region8: #{tpu_custom_call.1} parent=1 // loop_exit
      _
    %1504 = vsyncpa [#allocation3], 1
    %s1505 = scalar_lea.sflag [#allocation3], 1
    %1506 = vsyncpa %s1505, 1

</llo_original>
